<compile_context>
chip_gen: v7x
topology: tpu7x:2x2x1
jax: 0.10.0
libtpu: 0.0.40
codegen_flags: <defaults>
</compile_context>

<pallas_src>
import math
import jax
import jax.numpy as jnp
import numpy as np
from jax.experimental import pallas as pl
from jax.experimental.pallas import tpu as pltpu

_LANE = 128
_SUBLANE = 8


def _round_up(x, m):
    return ((x + m - 1) // m) * m


def _cdiv(a, b):
    return -(-a // b)


def _pad2d(a, rows, cols):
    r, c = a.shape
    return jnp.pad(a, ((0, rows - r), (0, cols - c)))


def _softplus(x):
    # log(1 + exp(x)), numerically stable
    return jnp.logaddexp(x, 0.0)


def _make_kernel(e_p, compute_dtype):
    def kernel(x_ref, y_ref, eps_ref,                 # streamed batch tiles
               wbx_ref, wby_ref, bb_ref,              # encoder base (split on x|y)
               wml_ref, bml_ref,                      # fused mean|logvar head
               wd1_ref, bd1_ref,                      # decoder L1 (fused [z|y] rows)
               wd2_ref, bd2_ref,                      # decoder L2
               mean_ref, logvar_ref, p_ref,           # outputs
               zy_ref):                               # VMEM scratch (TB, E_P + NC_P)
        cdt = compute_dtype
        x = x_ref[...].astype(cdt)
        y = y_ref[...].astype(cdt)

        # ---- encoder base: softplus(x @ Wbx + y @ Wby + b)  (y streamed once) ----
        h = _softplus(
            jnp.dot(x, wbx_ref[...], preferred_element_type=jnp.float32)
            + jnp.dot(y, wby_ref[...], preferred_element_type=jnp.float32)
            + bb_ref[...])

        # ---- fused mean/logvar head: one matmul, lane-aligned split ----
        ml = (jnp.dot(h.astype(cdt), wml_ref[...],
                      preferred_element_type=jnp.float32) + bml_ref[...])
        mean = ml[:, :e_p]
        logvar = ml[:, e_p:]

        # ---- reparameterize ----
        z = mean + eps_ref[...] * jnp.exp(0.5 * logvar)

        # ---- decoder L1: assemble [z | y] in VMEM (two lane-aligned stores)
        #      -> single K=(E_P+NC_P) matmul (matches 256-deep v6e/v7x MXU) ----
        zy_ref[:, :e_p] = z.astype(cdt)
        zy_ref[:, e_p:] = y
        h2 = _softplus(
            jnp.dot(zy_ref[...], wd1_ref[...],
                    preferred_element_type=jnp.float32) + bd1_ref[...])

        # ---- decoder L2 + sigmoid ----
        logits = (jnp.dot(h2.astype(cdt), wd2_ref[...],
                          preferred_element_type=jnp.float32) + bd2_ref[...])

        mean_ref[...] = mean
        logvar_ref[...] = logvar
        p_ref[...] = jax.nn.sigmoid(logits)

    return kernel


def xavier_uniform(key, fan_in, fan_out):
    # matches torch.nn.init.xavier_uniform_ on an (out, in) weight,
    # stored here transposed as (in, out)
    bound = math.sqrt(6.0 / (fan_in + fan_out))
    return jax.random.uniform(key, (fan_in, fan_out), jnp.float32, -bound, bound)


def init_m2_params(key, inputsz, numclass, hiddensz, embeddingsz):
    ks = jax.random.split(key, 5)
    return {
        # Encoder base (shared by mean & logvar heads)
        "w_base": xavier_uniform(ks[0], inputsz + numclass, hiddensz),
        "b_base": jnp.zeros((1, hiddensz), jnp.float32),
        "w_mean": xavier_uniform(ks[1], hiddensz, embeddingsz),
        "b_mean": jnp.zeros((1, embeddingsz), jnp.float32),
        "w_logvar": xavier_uniform(ks[2], hiddensz, embeddingsz),
        "b_logvar": jnp.zeros((1, embeddingsz), jnp.float32),
        # Decoder
        "w_dec1": xavier_uniform(ks[3], numclass + embeddingsz, hiddensz),
        "b_dec1": jnp.zeros((1, hiddensz), jnp.float32),
        "w_dec2": xavier_uniform(ks[4], hiddensz, inputsz),
        "b_dec2": jnp.zeros((1, inputsz), jnp.float32),
    }


def m2_forward(x, y, eps, params, inputsz, numclass, hiddensz, embeddingsz,
               block_b=512, use_bf16=False):
    B = x.shape[0]
    compute_dtype = jnp.bfloat16 if use_bf16 else jnp.float32
    w_itemsize = 2 if use_bf16 else 4

    # --- padded (lane-dense) feature dims ---
    IN_P = _round_up(inputsz, _LANE)
    NC_P = _round_up(numclass, _LANE)
    H_P = _round_up(hiddensz, _LANE)
    E_P = _round_up(embeddingsz, _LANE)

    # --- batch tile: large (amortizes ~0.35us/step overhead); split so the
    # grid has >=2 steps whenever B allows it (keeps both v7x TCs busy) ---
    TB = min(block_b, _round_up(B, _SUBLANE))
    if B >= 2 * _SUBLANE and _cdiv(B, TB) < 2:
        TB = _round_up(_cdiv(B, 2), _SUBLANE)
    B_P = _round_up(B, TB)
    grid = (B_P // TB,)

    # --- streamed inputs (f32, zero padded; padded rows/cols have no effect) ---
    x_p = _pad2d(x, B_P, IN_P)
    y_p = _pad2d(y, B_P, NC_P)
    eps_p = _pad2d(eps, B_P, E_P)

    # --- resident weights (compute dtype) / biases (f32), zero padded.
    # NOTE: zero padding of the weight ROWS is load-bearing (see header). ---
    wdt = compute_dtype
    w_bx = _pad2d(params["w_base"][:inputsz], IN_P, H_P).astype(wdt)
    w_by = _pad2d(params["w_base"][inputsz:], NC_P, H_P).astype(wdt)
    b_b = _pad2d(params["b_base"], 1, H_P)
    w_ml = jnp.concatenate(
        [_pad2d(params["w_mean"], H_P, E_P),
         _pad2d(params["w_logvar"], H_P, E_P)], axis=1).astype(wdt)
    b_ml = jnp.concatenate(
        [_pad2d(params["b_mean"], 1, E_P),
         _pad2d(params["b_logvar"], 1, E_P)], axis=1)
    # decoder L1: rows ordered [z-block (E_P) | y-block (NC_P)] to match scratch
    w_d1 = jnp.concatenate(
        [_pad2d(params["w_dec1"][:embeddingsz], E_P, H_P),
         _pad2d(params["w_dec1"][embeddingsz:], NC_P, H_P)], axis=0).astype(wdt)
    b_d1 = _pad2d(params["b_dec1"], 1, H_P)
    w_d2 = _pad2d(params["w_dec2"], H_P, IN_P).astype(wdt)
    b_d2 = _pad2d(params["b_dec2"], 1, IN_P)

    args = (x_p, y_p, eps_p, w_bx, w_by, b_b, w_ml, b_ml, w_d1, b_d1, w_d2, b_d2)

    # --- explicit VMEM budget (conservative: assumes 2 buffers everywhere);
    # clamp to the v7x physical limit so a v6e config never silently spills ---
    weight_elems = ((IN_P + NC_P) * H_P + H_P * 2 * E_P
                    + (E_P + NC_P) * H_P + H_P * IN_P)
    bias_bytes = 4 * (H_P + 2 * E_P + H_P + IN_P)
    stream_bytes = 2 * TB * (IN_P + NC_P + E_P) * 4
    out_bytes = 2 * TB * (2 * E_P + IN_P) * 4
    weight_bytes = 2 * (weight_elems * w_itemsize + bias_bytes)
    scratch_bytes = TB * (E_P + NC_P) * w_itemsize
    budget = stream_bytes + out_bytes + weight_bytes + scratch_bytes
    vmem_limit = max(32 << 20, min(int(budget * 1.25) + (2 << 20), 64 << 20))

    flops = 2 * B_P * ((IN_P + NC_P) * H_P + H_P * 2 * E_P
                       + (E_P + NC_P) * H_P + H_P * IN_P)
    transcendentals = B_P * (2 * H_P + E_P + IN_P)
    bytes_accessed = (4 * B_P * (IN_P + NC_P + E_P + 2 * E_P + IN_P)
                      + weight_elems * w_itemsize + bias_bytes)

    kernel = _make_kernel(E_P, compute_dtype)

    def batch_spec(width):
        return pl.BlockSpec((TB, width), lambda i: (i, 0))

    def build(single_buffer_weights):
        if single_buffer_weights:
            def resident(shape):
                # constant index_map => never re-DMA'd across grid steps;
                # single buffer halves the resident-weight VMEM footprint.
                return pl.BlockSpec(shape, lambda i: (0, 0),
                                    pipeline_mode=pl.Buffered(1))
        else:
            def resident(shape):
                return pl.BlockSpec(shape, lambda i: (0, 0))

        in_specs = [
            batch_spec(IN_P), batch_spec(NC_P), batch_spec(E_P),
            resident((IN_P, H_P)), resident((NC_P, H_P)), resident((1, H_P)),
            resident((H_P, 2 * E_P)), resident((1, 2 * E_P)),
            resident((E_P + NC_P, H_P)), resident((1, H_P)),
            resident((H_P, IN_P)), resident((1, IN_P)),
        ]
        out_specs = (batch_spec(E_P), batch_spec(E_P), batch_spec(IN_P))
        out_shape = (
            jax.ShapeDtypeStruct((B_P, E_P), jnp.float32),   # mean (padded)
            jax.ShapeDtypeStruct((B_P, E_P), jnp.float32),   # logvar (padded)
            jax.ShapeDtypeStruct((B_P, IN_P), jnp.float32),  # p (padded)
        )
        return pl.pallas_call(
            kernel,
            grid=grid,
            in_specs=in_specs,
            out_specs=out_specs,
            out_shape=out_shape,
            scratch_shapes=[pltpu.VMEM((TB, E_P + NC_P), compute_dtype)],
            compiler_params=pltpu.CompilerParams(
                dimension_semantics=("parallel",),
                vmem_limit_bytes=vmem_limit,
            ),
            cost_estimate=pl.CostEstimate(
                flops=flops,
                transcendentals=transcendentals,
                bytes_accessed=bytes_accessed,
            ),
        )

    try:
        mean_p, logvar_p, p_p = build(single_buffer_weights=True)(*args)
    except Exception:
        # pl.Buffered(1) not supported by this jax/Mosaic version -> fall back
        # to default double-buffered resident weights (identical semantics).
        mean_p, logvar_p, p_p = build(single_buffer_weights=False)(*args)

    # slice padding back off
    return (mean_p[:B, :embeddingsz],
            logvar_p[:B, :embeddingsz],
            p_p[:B, :inputsz])


def m2_forward_ref(x, y, eps, params):
    """Pure-JAX reference mirroring the PyTorch module."""
    xy = jnp.concatenate([x, y], axis=1)
    h = jax.nn.softplus(xy @ params["w_base"] + params["b_base"])
    mean = h @ params["w_mean"] + params["b_mean"]
    logvar = h @ params["w_logvar"] + params["b_logvar"]
    z = mean + eps * jnp.exp(0.5 * logvar)
    zy = jnp.concatenate([z, y], axis=1)
    h2 = jax.nn.softplus(zy @ params["w_dec1"] + params["b_dec1"])
    p = jax.nn.sigmoid(h2 @ params["w_dec2"] + params["b_dec2"])
    return mean, logvar, p


if __name__ == "__main__":
    # Small shapes consistent with the module's forward
    inputsz, numclass, hiddensz, embeddingsz = 64, 8, 32, 16

    key = jax.random.PRNGKey(0)
    k_params, k_data = jax.random.split(key, 2)
    params = init_m2_params(k_params, inputsz, numclass, hiddensz, embeddingsz)

    # B=8: single grid step; B=48: TB is split -> 2 grid steps (exercises the
    # streamed-tile pipelining and the v7x grid-splitting path).
    for B in (8, 48):
        kx, ky, ke = jax.random.split(jax.random.fold_in(k_data, B), 3)
        # x in [0,1] (bernoulli decoder target domain), y one-hot labels
        x = jax.random.uniform(kx, (B, inputsz), jnp.float32)
        labels = jax.random.randint(ky, (B,), 0, numclass)
        y = jax.nn.one_hot(labels, numclass, dtype=jnp.float32)
        # reparameterization noise (torch.randn_like) drawn outside the kernel
        eps = jax.random.normal(ke, (B, embeddingsz), jnp.float32)

        mean, logvar, p = jax.block_until_ready(
            m2_forward(x, y, eps, params, inputsz, numclass, hiddensz, embeddingsz)
        )

        # correctness check against pure-JAX reference (f32 path, tight tol)
        mean_r, logvar_r, p_r = m2_forward_ref(x, y, eps, params)
        np.testing.assert_allclose(np.asarray(mean), np.asarray(mean_r),
                                   atol=1e-5, rtol=1e-5)
        np.testing.assert_allclose(np.asarray(logvar), np.asarray(logvar_r),
                                   atol=1e-5, rtol=1e-5)
        np.testing.assert_allclose(np.asarray(p), np.asarray(p_r),
                                   atol=1e-5, rtol=1e-5)

    print("KERNEL_OK")
</pallas_src>

<mosaic_0001>
module attributes {stable_mosaic.version = 11 : i64} {
  func.func @kernel(%arg0: i32, %arg1: memref<8x128xf32, #tpu.memory_space<vmem>>, %arg2: memref<8x128xf32, #tpu.memory_space<vmem>>, %arg3: memref<8x128xf32, #tpu.memory_space<vmem>>, %arg4: memref<128x128xf32, #tpu.memory_space<vmem>>, %arg5: memref<128x128xf32, #tpu.memory_space<vmem>>, %arg6: memref<1x128xf32, #tpu.memory_space<vmem>>, %arg7: memref<128x256xf32, #tpu.memory_space<vmem>>, %arg8: memref<1x256xf32, #tpu.memory_space<vmem>>, %arg9: memref<256x128xf32, #tpu.memory_space<vmem>>, %arg10: memref<1x128xf32, #tpu.memory_space<vmem>>, %arg11: memref<128x128xf32, #tpu.memory_space<vmem>>, %arg12: memref<1x128xf32, #tpu.memory_space<vmem>>, %arg13: memref<8x128xf32, #tpu.memory_space<vmem>>, %arg14: memref<8x128xf32, #tpu.memory_space<vmem>>, %arg15: memref<8x128xf32, #tpu.memory_space<vmem>>, %arg16: memref<8x256xf32, #tpu.memory_space<vmem>>) attributes {dimension_semantics = [#tpu.dimension_semantics<parallel>], iteration_bounds = array<i64: 1>, scalar_prefetch = 0 : i64, scratch_operands = 1 : i64, tpu.core_type = #tpu.core_type<tc>, window_params = [{transform_indices = @transform_0, window_bounds = array<i64: 8, 128>}, {transform_indices = @transform_1, window_bounds = array<i64: 8, 128>}, {transform_indices = @transform_2, window_bounds = array<i64: 8, 128>}, {pipeline_mode = #tpu.pipeline_mode<synchronous>, transform_indices = @transform_3, window_bounds = array<i64: 128, 128>}, {pipeline_mode = #tpu.pipeline_mode<synchronous>, transform_indices = @transform_4, window_bounds = array<i64: 128, 128>}, {pipeline_mode = #tpu.pipeline_mode<synchronous>, transform_indices = @transform_5, window_bounds = array<i64: 1, 128>}, {pipeline_mode = #tpu.pipeline_mode<synchronous>, transform_indices = @transform_6, window_bounds = array<i64: 128, 256>}, {pipeline_mode = #tpu.pipeline_mode<synchronous>, transform_indices = @transform_7, window_bounds = array<i64: 1, 256>}, {pipeline_mode = #tpu.pipeline_mode<synchronous>, transform_indices = @transform_8, window_bounds = array<i64: 256, 128>}, {pipeline_mode = #tpu.pipeline_mode<synchronous>, transform_indices = @transform_9, window_bounds = array<i64: 1, 128>}, {pipeline_mode = #tpu.pipeline_mode<synchronous>, transform_indices = @transform_10, window_bounds = array<i64: 128, 128>}, {pipeline_mode = #tpu.pipeline_mode<synchronous>, transform_indices = @transform_11, window_bounds = array<i64: 1, 128>}, {transform_indices = @transform_12, window_bounds = array<i64: 8, 128>}, {transform_indices = @transform_13, window_bounds = array<i64: 8, 128>}, {transform_indices = @transform_14, window_bounds = array<i64: 8, 128>}]} {
    %c0 = arith.constant 0 : index
    %c0_0 = arith.constant 0 : index
    %0 = vector.load %arg1[%c0, %c0_0] : memref<8x128xf32, #tpu.memory_space<vmem>>, vector<8x128xf32>
    %c0_1 = arith.constant 0 : index
    %c0_2 = arith.constant 0 : index
    %1 = vector.load %arg2[%c0_1, %c0_2] : memref<8x128xf32, #tpu.memory_space<vmem>>, vector<8x128xf32>
    %c0_3 = arith.constant 0 : index
    %c0_4 = arith.constant 0 : index
    %2 = vector.load %arg4[%c0_3, %c0_4] : memref<128x128xf32, #tpu.memory_space<vmem>>, vector<128x128xf32>
    %cst = arith.constant dense<0.000000e+00> : vector<8x128xf32>
    %3 = tpu.matmul %0, %2, %cst {dimension_numbers = #tpu.dot_dimension_numbers<[1], [0], [0], [1], [0, 0, 1, 1], [], []>} : vector<8x128xf32>, vector<128x128xf32>, vector<8x128xf32> -> vector<8x128xf32>
    %c0_5 = arith.constant 0 : index
    %c0_6 = arith.constant 0 : index
    %4 = vector.load %arg5[%c0_5, %c0_6] : memref<128x128xf32, #tpu.memory_space<vmem>>, vector<128x128xf32>
    %cst_7 = arith.constant dense<0.000000e+00> : vector<8x128xf32>
    %5 = tpu.matmul %1, %4, %cst_7 {dimension_numbers = #tpu.dot_dimension_numbers<[1], [0], [0], [1], [0, 0, 1, 1], [], []>} : vector<8x128xf32>, vector<128x128xf32>, vector<8x128xf32> -> vector<8x128xf32>
    %6 = arith.addf %3, %5 : vector<8x128xf32>
    %c0_8 = arith.constant 0 : index
    %c0_9 = arith.constant 0 : index
    %7 = vector.load %arg6[%c0_8, %c0_9] : memref<1x128xf32, #tpu.memory_space<vmem>>, vector<1x128xf32>
    %8 = vector.broadcast %7 : vector<1x128xf32> to vector<8x128xf32>
    %9 = arith.addf %6, %8 : vector<8x128xf32>
    %cst_10 = arith.constant 0.000000e+00 : f32
    %10 = vector.broadcast %cst_10 : f32 to vector<8x128xf32>
    %11 = arith.maximumf %9, %10 : vector<8x128xf32>
    %12 = vector.broadcast %cst_10 : f32 to vector<8x128xf32>
    %13 = arith.subf %9, %12 : vector<8x128xf32>
    %14 = arith.cmpf one, %13, %13 : vector<8x128xf32>
    %15 = vector.broadcast %cst_10 : f32 to vector<8x128xf32>
    %16 = arith.addf %9, %15 : vector<8x128xf32>
    %17 = math.absf %13 : vector<8x128xf32>
    %cst_11 = arith.constant 0.000000e+00 : f32
    %18 = vector.broadcast %cst_11 : f32 to vector<8x128xf32>
    %19 = arith.subf %18, %17 : vector<8x128xf32>
    %20 = math.exp %19 : vector<8x128xf32>
    %21 = math.log1p %20 : vector<8x128xf32>
    %22 = arith.addf %11, %21 : vector<8x128xf32>
    %23 = arith.select %14, %16, %22 : vector<8x128xi1>, vector<8x128xf32>
    %c0_12 = arith.constant 0 : index
    %c0_13 = arith.constant 0 : index
    %24 = vector.load %arg7[%c0_12, %c0_13] : memref<128x256xf32, #tpu.memory_space<vmem>>, vector<128x256xf32>
    %cst_14 = arith.constant dense<0.000000e+00> : vector<8x256xf32>
    %25 = tpu.matmul %23, %24, %cst_14 {dimension_numbers = #tpu.dot_dimension_numbers<[1], [0], [0], [1], [0, 0, 1, 1], [], []>} : vector<8x128xf32>, vector<128x256xf32>, vector<8x256xf32> -> vector<8x256xf32>
    %c0_15 = arith.constant 0 : index
    %c0_16 = arith.constant 0 : index
    %26 = vector.load %arg8[%c0_15, %c0_16] : memref<1x256xf32, #tpu.memory_space<vmem>>, vector<1x256xf32>
    %27 = vector.broadcast %26 : vector<1x256xf32> to vector<8x256xf32>
    %28 = arith.addf %25, %27 : vector<8x256xf32>
    %29 = vector.extract_strided_slice %28 {offsets = [0, 0], sizes = [8, 128], strides = [1, 1]} : vector<8x256xf32> to vector<8x128xf32>
    %30 = vector.extract_strided_slice %28 {offsets = [0, 128], sizes = [8, 128], strides = [1, 1]} : vector<8x256xf32> to vector<8x128xf32>
    %c0_17 = arith.constant 0 : index
    %c0_18 = arith.constant 0 : index
    %31 = vector.load %arg3[%c0_17, %c0_18] : memref<8x128xf32, #tpu.memory_space<vmem>>, vector<8x128xf32>
    %cst_19 = arith.constant 5.000000e-01 : f32
    %32 = vector.broadcast %cst_19 : f32 to vector<8x128xf32>
    %33 = arith.mulf %32, %30 : vector<8x128xf32>
    %34 = math.exp %33 : vector<8x128xf32>
    %35 = arith.mulf %31, %34 : vector<8x128xf32>
    %36 = arith.addf %29, %35 : vector<8x128xf32>
    %c0_20 = arith.constant 0 : index
    %c0_21 = arith.constant 0 : index
    %37 = vector.load %arg16[%c0_20, %c0_21] : memref<8x256xf32, #tpu.memory_space<vmem>>, vector<8x128xf32>
    tpu.vector_store %arg16[%c0_20, %c0_21], %36 {strides = array<i32>} : memref<8x256xf32, #tpu.memory_space<vmem>>, vector<8x128xf32>,
    %c0_22 = arith.constant 0 : index
    %c128 = arith.constant 128 : index
    %38 = vector.load %arg16[%c0_22, %c128] : memref<8x256xf32, #tpu.memory_space<vmem>>, vector<8x128xf32>
    tpu.vector_store %arg16[%c0_22, %c128], %1 {strides = array<i32>} : memref<8x256xf32, #tpu.memory_space<vmem>>, vector<8x128xf32>,
    %c0_23 = arith.constant 0 : index
    %c0_24 = arith.constant 0 : index
    %39 = vector.load %arg16[%c0_23, %c0_24] : memref<8x256xf32, #tpu.memory_space<vmem>>, vector<8x256xf32>
    %c0_25 = arith.constant 0 : index
    %c0_26 = arith.constant 0 : index
    %40 = vector.load %arg9[%c0_25, %c0_26] : memref<256x128xf32, #tpu.memory_space<vmem>>, vector<256x128xf32>
    %cst_27 = arith.constant dense<0.000000e+00> : vector<8x128xf32>
    %41 = tpu.matmul %39, %40, %cst_27 {dimension_numbers = #tpu.dot_dimension_numbers<[1], [0], [0], [1], [0, 0, 1, 1], [], []>} : vector<8x256xf32>, vector<256x128xf32>, vector<8x128xf32> -> vector<8x128xf32>
    %c0_28 = arith.constant 0 : index
    %c0_29 = arith.constant 0 : index
    %42 = vector.load %arg10[%c0_28, %c0_29] : memref<1x128xf32, #tpu.memory_space<vmem>>, vector<1x128xf32>
    %43 = vector.broadcast %42 : vector<1x128xf32> to vector<8x128xf32>
    %44 = arith.addf %41, %43 : vector<8x128xf32>
    %cst_30 = arith.constant 0.000000e+00 : f32
    %45 = vector.broadcast %cst_30 : f32 to vector<8x128xf32>
    %46 = arith.maximumf %44, %45 : vector<8x128xf32>
    %47 = vector.broadcast %cst_30 : f32 to vector<8x128xf32>
    %48 = arith.subf %44, %47 : vector<8x128xf32>
    %49 = arith.cmpf one, %48, %48 : vector<8x128xf32>
    %50 = vector.broadcast %cst_30 : f32 to vector<8x128xf32>
    %51 = arith.addf %44, %50 : vector<8x128xf32>
    %52 = math.absf %48 : vector<8x128xf32>
    %cst_31 = arith.constant 0.000000e+00 : f32
    %53 = vector.broadcast %cst_31 : f32 to vector<8x128xf32>
    %54 = arith.subf %53, %52 : vector<8x128xf32>
    %55 = math.exp %54 : vector<8x128xf32>
    %56 = math.log1p %55 : vector<8x128xf32>
    %57 = arith.addf %46, %56 : vector<8x128xf32>
    %58 = arith.select %49, %51, %57 : vector<8x128xi1>, vector<8x128xf32>
    %c0_32 = arith.constant 0 : index
    %c0_33 = arith.constant 0 : index
    %59 = vector.load %arg11[%c0_32, %c0_33] : memref<128x128xf32, #tpu.memory_space<vmem>>, vector<128x128xf32>
    %cst_34 = arith.constant dense<0.000000e+00> : vector<8x128xf32>
    %60 = tpu.matmul %58, %59, %cst_34 {dimension_numbers = #tpu.dot_dimension_numbers<[1], [0], [0], [1], [0, 0, 1, 1], [], []>} : vector<8x128xf32>, vector<128x128xf32>, vector<8x128xf32> -> vector<8x128xf32>
    %c0_35 = arith.constant 0 : index
    %c0_36 = arith.constant 0 : index
    %61 = vector.load %arg12[%c0_35, %c0_36] : memref<1x128xf32, #tpu.memory_space<vmem>>, vector<1x128xf32>
    %62 = vector.broadcast %61 : vector<1x128xf32> to vector<8x128xf32>
    %63 = arith.addf %60, %62 : vector<8x128xf32>
    %c0_37 = arith.constant 0 : index
    %c0_38 = arith.constant 0 : index
    %64 = vector.load %arg13[%c0_37, %c0_38] : memref<8x128xf32, #tpu.memory_space<vmem>>, vector<8x128xf32>
    tpu.vector_store %arg13[%c0_37, %c0_38], %29 {strides = array<i32>} : memref<8x128xf32, #tpu.memory_space<vmem>>, vector<8x128xf32>,
    %c0_39 = arith.constant 0 : index
    %c0_40 = arith.constant 0 : index
    %65 = vector.load %arg14[%c0_39, %c0_40] : memref<8x128xf32, #tpu.memory_space<vmem>>, vector<8x128xf32>
    tpu.vector_store %arg14[%c0_39, %c0_40], %30 {strides = array<i32>} : memref<8x128xf32, #tpu.memory_space<vmem>>, vector<8x128xf32>,
    %66 = arith.negf %63 : vector<8x128xf32>
    %67 = math.exp %66 : vector<8x128xf32>
    %cst_41 = arith.constant 1.000000e+00 : f32
    %68 = vector.broadcast %cst_41 : f32 to vector<8x128xf32>
    %69 = arith.addf %68, %67 : vector<8x128xf32>
    %70 = arith.divf %68, %69 : vector<8x128xf32>
    %c0_42 = arith.constant 0 : index
    %c0_43 = arith.constant 0 : index
    %71 = vector.load %arg15[%c0_42, %c0_43] : memref<8x128xf32, #tpu.memory_space<vmem>>, vector<8x128xf32>
    tpu.vector_store %arg15[%c0_42, %c0_43], %70 {strides = array<i32>} : memref<8x128xf32, #tpu.memory_space<vmem>>, vector<8x128xf32>,
    return
  }
  func.func @transform_0(%arg0: i32) -> (i32, i32) {
    %c0_i32 = arith.constant 0 : i32
    %c0_i32_0 = arith.constant 0 : i32
    return %arg0, %c0_i32 : i32, i32
  }
  func.func @transform_1(%arg0: i32) -> (i32, i32) {
    %c0_i32 = arith.constant 0 : i32
    %c0_i32_0 = arith.constant 0 : i32
    return %arg0, %c0_i32 : i32, i32
  }
  func.func @transform_2(%arg0: i32) -> (i32, i32) {
    %c0_i32 = arith.constant 0 : i32
    %c0_i32_0 = arith.constant 0 : i32
    return %arg0, %c0_i32 : i32, i32
  }
  func.func @transform_3(%arg0: i32) -> (i32, i32) {
    %c0_i32 = arith.constant 0 : i32
    %c0_i32_0 = arith.constant 0 : i32
    %c0_i32_1 = arith.constant 0 : i32
    return %c0_i32, %c0_i32_0 : i32, i32
  }
  func.func @transform_4(%arg0: i32) -> (i32, i32) {
    %c0_i32 = arith.constant 0 : i32
    %c0_i32_0 = arith.constant 0 : i32
    %c0_i32_1 = arith.constant 0 : i32
    return %c0_i32, %c0_i32_0 : i32, i32
  }
  func.func @transform_5(%arg0: i32) -> (i32, i32) {
    %c0_i32 = arith.constant 0 : i32
    %c0_i32_0 = arith.constant 0 : i32
    %c0_i32_1 = arith.constant 0 : i32
    return %c0_i32, %c0_i32_0 : i32, i32
  }
  func.func @transform_6(%arg0: i32) -> (i32, i32) {
    %c0_i32 = arith.constant 0 : i32
    %c0_i32_0 = arith.constant 0 : i32
    %c0_i32_1 = arith.constant 0 : i32
    return %c0_i32, %c0_i32_0 : i32, i32
  }
  func.func @transform_7(%arg0: i32) -> (i32, i32) {
    %c0_i32 = arith.constant 0 : i32
    %c0_i32_0 = arith.constant 0 : i32
    %c0_i32_1 = arith.constant 0 : i32
    return %c0_i32, %c0_i32_0 : i32, i32
  }
  func.func @transform_8(%arg0: i32) -> (i32, i32) {
    %c0_i32 = arith.constant 0 : i32
    %c0_i32_0 = arith.constant 0 : i32
    %c0_i32_1 = arith.constant 0 : i32
    return %c0_i32, %c0_i32_0 : i32, i32
  }
  func.func @transform_9(%arg0: i32) -> (i32, i32) {
    %c0_i32 = arith.constant 0 : i32
    %c0_i32_0 = arith.constant 0 : i32
    %c0_i32_1 = arith.constant 0 : i32
    return %c0_i32, %c0_i32_0 : i32, i32
  }
  func.func @transform_10(%arg0: i32) -> (i32, i32) {
    %c0_i32 = arith.constant 0 : i32
    %c0_i32_0 = arith.constant 0 : i32
    %c0_i32_1 = arith.constant 0 : i32
    return %c0_i32, %c0_i32_0 : i32, i32
  }
  func.func @transform_11(%arg0: i32) -> (i32, i32) {
    %c0_i32 = arith.constant 0 : i32
    %c0_i32_0 = arith.constant 0 : i32
    %c0_i32_1 = arith.constant 0 : i32
    return %c0_i32, %c0_i32_0 : i32, i32
  }
  func.func @transform_12(%arg0: i32) -> (i32, i32) {
    %c0_i32 = arith.constant 0 : i32
    %c0_i32_0 = arith.constant 0 : i32
    return %arg0, %c0_i32 : i32, i32
  }
  func.func @transform_13(%arg0: i32) -> (i32, i32) {
    %c0_i32 = arith.constant 0 : i32
    %c0_i32_0 = arith.constant 0 : i32
    return %arg0, %c0_i32 : i32, i32
  }
  func.func @transform_14(%arg0: i32) -> (i32, i32) {
    %c0_i32 = arith.constant 0 : i32
    %c0_i32_0 = arith.constant 0 : i32
    return %arg0, %c0_i32 : i32, i32
  }
}

module attributes {stable_mosaic.version = 11 : i64} {
  func.func @kernel(%arg0: i32, %arg1: memref<8x128xf32, #tpu.memory_space<vmem>>, %arg2: memref<8x128xf32, #tpu.memory_space<vmem>>, %arg3: memref<8x128xf32, #tpu.memory_space<vmem>>, %arg4: memref<128x128xf32, #tpu.memory_space<vmem>>, %arg5: memref<128x128xf32, #tpu.memory_space<vmem>>, %arg6: memref<1x128xf32, #tpu.memory_space<vmem>>, %arg7: memref<128x256xf32, #tpu.memory_space<vmem>>, %arg8: memref<1x256xf32, #tpu.memory_space<vmem>>, %arg9: memref<256x128xf32, #tpu.memory_space<vmem>>, %arg10: memref<1x128xf32, #tpu.memory_space<vmem>>, %arg11: memref<128x128xf32, #tpu.memory_space<vmem>>, %arg12: memref<1x128xf32, #tpu.memory_space<vmem>>, %arg13: memref<8x128xf32, #tpu.memory_space<vmem>>, %arg14: memref<8x128xf32, #tpu.memory_space<vmem>>, %arg15: memref<8x128xf32, #tpu.memory_space<vmem>>, %arg16: memref<8x256xf32, #tpu.memory_space<vmem>>) attributes {dimension_semantics = [#tpu.dimension_semantics<parallel>], iteration_bounds = array<i64: 1>, scalar_prefetch = 0 : i64, scratch_operands = 1 : i64, tpu.core_type = #tpu.core_type<tc>, window_params = [{transform_indices = @transform_0, window_bounds = array<i64: 8, 128>}, {transform_indices = @transform_1, window_bounds = array<i64: 8, 128>}, {transform_indices = @transform_2, window_bounds = array<i64: 8, 128>}, {pipeline_mode = #tpu.pipeline_mode<synchronous>, transform_indices = @transform_3, window_bounds = array<i64: 128, 128>}, {pipeline_mode = #tpu.pipeline_mode<synchronous>, transform_indices = @transform_4, window_bounds = array<i64: 128, 128>}, {pipeline_mode = #tpu.pipeline_mode<synchronous>, transform_indices = @transform_5, window_bounds = array<i64: 1, 128>}, {pipeline_mode = #tpu.pipeline_mode<synchronous>, transform_indices = @transform_6, window_bounds = array<i64: 128, 256>}, {pipeline_mode = #tpu.pipeline_mode<synchronous>, transform_indices = @transform_7, window_bounds = array<i64: 1, 256>}, {pipeline_mode = #tpu.pipeline_mode<synchronous>, transform_indices = @transform_8, window_bounds = array<i64: 256, 128>}, {pipeline_mode = #tpu.pipeline_mode<synchronous>, transform_indices = @transform_9, window_bounds = array<i64: 1, 128>}, {pipeline_mode = #tpu.pipeline_mode<synchronous>, transform_indices = @transform_10, window_bounds = array<i64: 128, 128>}, {pipeline_mode = #tpu.pipeline_mode<synchronous>, transform_indices = @transform_11, window_bounds = array<i64: 1, 128>}, {transform_indices = @transform_12, window_bounds = array<i64: 8, 128>}, {transform_indices = @transform_13, window_bounds = array<i64: 8, 128>}, {transform_indices = @transform_14, window_bounds = array<i64: 8, 128>}]} {
    %c0 = arith.constant 0 : index
    %c0_0 = arith.constant 0 : index
    %0 = vector.load %arg1[%c0, %c0_0] : memref<8x128xf32, #tpu.memory_space<vmem>>, vector<8x128xf32>
    %c0_1 = arith.constant 0 : index
    %c0_2 = arith.constant 0 : index
    %1 = vector.load %arg2[%c0_1, %c0_2] : memref<8x128xf32, #tpu.memory_space<vmem>>, vector<8x128xf32>
    %c0_3 = arith.constant 0 : index
    %c0_4 = arith.constant 0 : index
    %2 = vector.load %arg4[%c0_3, %c0_4] : memref<128x128xf32, #tpu.memory_space<vmem>>, vector<128x128xf32>
    %cst = arith.constant dense<0.000000e+00> : vector<8x128xf32>
    %3 = tpu.matmul %0, %2, %cst {dimension_numbers = #tpu.dot_dimension_numbers<[1], [0], [0], [1], [0, 0, 1, 1], [], []>} : vector<8x128xf32>, vector<128x128xf32>, vector<8x128xf32> -> vector<8x128xf32>
    %c0_5 = arith.constant 0 : index
    %c0_6 = arith.constant 0 : index
    %4 = vector.load %arg5[%c0_5, %c0_6] : memref<128x128xf32, #tpu.memory_space<vmem>>, vector<128x128xf32>
    %cst_7 = arith.constant dense<0.000000e+00> : vector<8x128xf32>
    %5 = tpu.matmul %1, %4, %cst_7 {dimension_numbers = #tpu.dot_dimension_numbers<[1], [0], [0], [1], [0, 0, 1, 1], [], []>} : vector<8x128xf32>, vector<128x128xf32>, vector<8x128xf32> -> vector<8x128xf32>
    %6 = arith.addf %3, %5 : vector<8x128xf32>
    %c0_8 = arith.constant 0 : index
    %c0_9 = arith.constant 0 : index
    %7 = vector.load %arg6[%c0_8, %c0_9] : memref<1x128xf32, #tpu.memory_space<vmem>>, vector<1x128xf32>
    %8 = vector.broadcast %7 : vector<1x128xf32> to vector<8x128xf32>
    %9 = arith.addf %6, %8 : vector<8x128xf32>
    %cst_10 = arith.constant 0.000000e+00 : f32
    %10 = vector.broadcast %cst_10 : f32 to vector<8x128xf32>
    %11 = arith.maximumf %9, %10 : vector<8x128xf32>
    %12 = vector.broadcast %cst_10 : f32 to vector<8x128xf32>
    %13 = arith.subf %9, %12 : vector<8x128xf32>
    %14 = arith.cmpf one, %13, %13 : vector<8x128xf32>
    %15 = vector.broadcast %cst_10 : f32 to vector<8x128xf32>
    %16 = arith.addf %9, %15 : vector<8x128xf32>
    %17 = math.absf %13 : vector<8x128xf32>
    %cst_11 = arith.constant 0.000000e+00 : f32
    %18 = vector.broadcast %cst_11 : f32 to vector<8x128xf32>
    %19 = arith.subf %18, %17 : vector<8x128xf32>
    %20 = math.exp %19 : vector<8x128xf32>
    %21 = math.log1p %20 : vector<8x128xf32>
    %22 = arith.addf %11, %21 : vector<8x128xf32>
    %23 = arith.select %14, %16, %22 : vector<8x128xi1>, vector<8x128xf32>
    %c0_12 = arith.constant 0 : index
    %c0_13 = arith.constant 0 : index
    %24 = vector.load %arg7[%c0_12, %c0_13] : memref<128x256xf32, #tpu.memory_space<vmem>>, vector<128x256xf32>
    %cst_14 = arith.constant dense<0.000000e+00> : vector<8x256xf32>
    %25 = tpu.matmul %23, %24, %cst_14 {dimension_numbers = #tpu.dot_dimension_numbers<[1], [0], [0], [1], [0, 0, 1, 1], [], []>} : vector<8x128xf32>, vector<128x256xf32>, vector<8x256xf32> -> vector<8x256xf32>
    %c0_15 = arith.constant 0 : index
    %c0_16 = arith.constant 0 : index
    %26 = vector.load %arg8[%c0_15, %c0_16] : memref<1x256xf32, #tpu.memory_space<vmem>>, vector<1x256xf32>
    %27 = vector.broadcast %26 : vector<1x256xf32> to vector<8x256xf32>
    %28 = arith.addf %25, %27 : vector<8x256xf32>
    %29 = vector.extract_strided_slice %28 {offsets = [0, 0], sizes = [8, 128], strides = [1, 1]} : vector<8x256xf32> to vector<8x128xf32>
    %30 = vector.extract_strided_slice %28 {offsets = [0, 128], sizes = [8, 128], strides = [1, 1]} : vector<8x256xf32> to vector<8x128xf32>
    %c0_17 = arith.constant 0 : index
    %c0_18 = arith.constant 0 : index
    %31 = vector.load %arg3[%c0_17, %c0_18] : memref<8x128xf32, #tpu.memory_space<vmem>>, vector<8x128xf32>
    %cst_19 = arith.constant 5.000000e-01 : f32
    %32 = vector.broadcast %cst_19 : f32 to vector<8x128xf32>
    %33 = arith.mulf %32, %30 : vector<8x128xf32>
    %34 = math.exp %33 : vector<8x128xf32>
    %35 = arith.mulf %31, %34 : vector<8x128xf32>
    %36 = arith.addf %29, %35 : vector<8x128xf32>
    %c0_20 = arith.constant 0 : index
    %c0_21 = arith.constant 0 : index
    %37 = vector.load %arg16[%c0_20, %c0_21] : memref<8x256xf32, #tpu.memory_space<vmem>>, vector<8x128xf32>
    tpu.vector_store %arg16[%c0_20, %c0_21], %36 {strides = array<i32>} : memref<8x256xf32, #tpu.memory_space<vmem>>, vector<8x128xf32>,
    %c0_22 = arith.constant 0 : index
    %c128 = arith.constant 128 : index
    %38 = vector.load %arg16[%c0_22, %c128] : memref<8x256xf32, #tpu.memory_space<vmem>>, vector<8x128xf32>
    tpu.vector_store %arg16[%c0_22, %c128], %1 {strides = array<i32>} : memref<8x256xf32, #tpu.memory_space<vmem>>, vector<8x128xf32>,
    %c0_23 = arith.constant 0 : index
    %c0_24 = arith.constant 0 : index
    %39 = vector.load %arg16[%c0_23, %c0_24] : memref<8x256xf32, #tpu.memory_space<vmem>>, vector<8x256xf32>
    %c0_25 = arith.constant 0 : index
    %c0_26 = arith.constant 0 : index
    %40 = vector.load %arg9[%c0_25, %c0_26] : memref<256x128xf32, #tpu.memory_space<vmem>>, vector<256x128xf32>
    %cst_27 = arith.constant dense<0.000000e+00> : vector<8x128xf32>
    %41 = tpu.matmul %39, %40, %cst_27 {dimension_numbers = #tpu.dot_dimension_numbers<[1], [0], [0], [1], [0, 0, 1, 1], [], []>} : vector<8x256xf32>, vector<256x128xf32>, vector<8x128xf32> -> vector<8x128xf32>
    %c0_28 = arith.constant 0 : index
    %c0_29 = arith.constant 0 : index
    %42 = vector.load %arg10[%c0_28, %c0_29] : memref<1x128xf32, #tpu.memory_space<vmem>>, vector<1x128xf32>
    %43 = vector.broadcast %42 : vector<1x128xf32> to vector<8x128xf32>
    %44 = arith.addf %41, %43 : vector<8x128xf32>
    %cst_30 = arith.constant 0.000000e+00 : f32
    %45 = vector.broadcast %cst_30 : f32 to vector<8x128xf32>
    %46 = arith.maximumf %44, %45 : vector<8x128xf32>
    %47 = vector.broadcast %cst_30 : f32 to vector<8x128xf32>
    %48 = arith.subf %44, %47 : vector<8x128xf32>
    %49 = arith.cmpf one, %48, %48 : vector<8x128xf32>
    %50 = vector.broadcast %cst_30 : f32 to vector<8x128xf32>
    %51 = arith.addf %44, %50 : vector<8x128xf32>
    %52 = math.absf %48 : vector<8x128xf32>
    %cst_31 = arith.constant 0.000000e+00 : f32
    %53 = vector.broadcast %cst_31 : f32 to vector<8x128xf32>
    %54 = arith.subf %53, %52 : vector<8x128xf32>
    %55 = math.exp %54 : vector<8x128xf32>
    %56 = math.log1p %55 : vector<8x128xf32>
    %57 = arith.addf %46, %56 : vector<8x128xf32>
    %58 = arith.select %49, %51, %57 : vector<8x128xi1>, vector<8x128xf32>
    %c0_32 = arith.constant 0 : index
    %c0_33 = arith.constant 0 : index
    %59 = vector.load %arg11[%c0_32, %c0_33] : memref<128x128xf32, #tpu.memory_space<vmem>>, vector<128x128xf32>
    %cst_34 = arith.constant dense<0.000000e+00> : vector<8x128xf32>
    %60 = tpu.matmul %58, %59, %cst_34 {dimension_numbers = #tpu.dot_dimension_numbers<[1], [0], [0], [1], [0, 0, 1, 1], [], []>} : vector<8x128xf32>, vector<128x128xf32>, vector<8x128xf32> -> vector<8x128xf32>
    %c0_35 = arith.constant 0 : index
    %c0_36 = arith.constant 0 : index
    %61 = vector.load %arg12[%c0_35, %c0_36] : memref<1x128xf32, #tpu.memory_space<vmem>>, vector<1x128xf32>
    %62 = vector.broadcast %61 : vector<1x128xf32> to vector<8x128xf32>
    %63 = arith.addf %60, %62 : vector<8x128xf32>
    %c0_37 = arith.constant 0 : index
    %c0_38 = arith.constant 0 : index
    %64 = vector.load %arg13[%c0_37, %c0_38] : memref<8x128xf32, #tpu.memory_space<vmem>>, vector<8x128xf32>
    tpu.vector_store %arg13[%c0_37, %c0_38], %29 {strides = array<i32>} : memref<8x128xf32, #tpu.memory_space<vmem>>, vector<8x128xf32>,
    %c0_39 = arith.constant 0 : index
    %c0_40 = arith.constant 0 : index
    %65 = vector.load %arg14[%c0_39, %c0_40] : memref<8x128xf32, #tpu.memory_space<vmem>>, vector<8x128xf32>
    tpu.vector_store %arg14[%c0_39, %c0_40], %30 {strides = array<i32>} : memref<8x128xf32, #tpu.memory_space<vmem>>, vector<8x128xf32>,
    %66 = arith.negf %63 : vector<8x128xf32>
    %67 = math.exp %66 : vector<8x128xf32>
    %cst_41 = arith.constant 1.000000e+00 : f32
    %68 = vector.broadcast %cst_41 : f32 to vector<8x128xf32>
    %69 = arith.addf %68, %67 : vector<8x128xf32>
    %70 = arith.divf %68, %69 : vector<8x128xf32>
    %c0_42 = arith.constant 0 : index
    %c0_43 = arith.constant 0 : index
    %71 = vector.load %arg15[%c0_42, %c0_43] : memref<8x128xf32, #tpu.memory_space<vmem>>, vector<8x128xf32>
    tpu.vector_store %arg15[%c0_42, %c0_43], %70 {strides = array<i32>} : memref<8x128xf32, #tpu.memory_space<vmem>>, vector<8x128xf32>,
    return
  }
  func.func @transform_0(%arg0: i32) -> (i32, i32) {
    %c0_i32 = arith.constant 0 : i32
    %c0_i32_0 = arith.constant 0 : i32
    return %arg0, %c0_i32 : i32, i32
  }
  func.func @transform_1(%arg0: i32) -> (i32, i32) {
    %c0_i32 = arith.constant 0 : i32
    %c0_i32_0 = arith.constant 0 : i32
    return %arg0, %c0_i32 : i32, i32
  }
  func.func @transform_2(%arg0: i32) -> (i32, i32) {
    %c0_i32 = arith.constant 0 : i32
    %c0_i32_0 = arith.constant 0 : i32
    return %arg0, %c0_i32 : i32, i32
  }
  func.func @transform_3(%arg0: i32) -> (i32, i32) {
    %c0_i32 = arith.constant 0 : i32
    %c0_i32_0 = arith.constant 0 : i32
    %c0_i32_1 = arith.constant 0 : i32
    return %c0_i32, %c0_i32_0 : i32, i32
  }
  func.func @transform_4(%arg0: i32) -> (i32, i32) {
    %c0_i32 = arith.constant 0 : i32
    %c0_i32_0 = arith.constant 0 : i32
    %c0_i32_1 = arith.constant 0 : i32
    return %c0_i32, %c0_i32_0 : i32, i32
  }
  func.func @transform_5(%arg0: i32) -> (i32, i32) {
    %c0_i32 = arith.constant 0 : i32
    %c0_i32_0 = arith.constant 0 : i32
    %c0_i32_1 = arith.constant 0 : i32
    return %c0_i32, %c0_i32_0 : i32, i32
  }
  func.func @transform_6(%arg0: i32) -> (i32, i32) {
    %c0_i32 = arith.constant 0 : i32
    %c0_i32_0 = arith.constant 0 : i32
    %c0_i32_1 = arith.constant 0 : i32
    return %c0_i32, %c0_i32_0 : i32, i32
  }
  func.func @transform_7(%arg0: i32) -> (i32, i32) {
    %c0_i32 = arith.constant 0 : i32
    %c0_i32_0 = arith.constant 0 : i32
    %c0_i32_1 = arith.constant 0 : i32
    return %c0_i32, %c0_i32_0 : i32, i32
  }
  func.func @transform_8(%arg0: i32) -> (i32, i32) {
    %c0_i32 = arith.constant 0 : i32
    %c0_i32_0 = arith.constant 0 : i32
    %c0_i32_1 = arith.constant 0 : i32
    return %c0_i32, %c0_i32_0 : i32, i32
  }
  func.func @transform_9(%arg0: i32) -> (i32, i32) {
    %c0_i32 = arith.constant 0 : i32
    %c0_i32_0 = arith.constant 0 : i32
    %c0_i32_1 = arith.constant 0 : i32
    return %c0_i32, %c0_i32_0 : i32, i32
  }
  func.func @transform_10(%arg0: i32) -> (i32, i32) {
    %c0_i32 = arith.constant 0 : i32
    %c0_i32_0 = arith.constant 0 : i32
    %c0_i32_1 = arith.constant 0 : i32
    return %c0_i32, %c0_i32_0 : i32, i32
  }
  func.func @transform_11(%arg0: i32) -> (i32, i32) {
    %c0_i32 = arith.constant 0 : i32
    %c0_i32_0 = arith.constant 0 : i32
    %c0_i32_1 = arith.constant 0 : i32
    return %c0_i32, %c0_i32_0 : i32, i32
  }
  func.func @transform_12(%arg0: i32) -> (i32, i32) {
    %c0_i32 = arith.constant 0 : i32
    %c0_i32_0 = arith.constant 0 : i32
    return %arg0, %c0_i32 : i32, i32
  }
  func.func @transform_13(%arg0: i32) -> (i32, i32) {
    %c0_i32 = arith.constant 0 : i32
    %c0_i32_0 = arith.constant 0 : i32
    return %arg0, %c0_i32 : i32, i32
  }
  func.func @transform_14(%arg0: i32) -> (i32, i32) {
    %c0_i32 = arith.constant 0 : i32
    %c0_i32_0 = arith.constant 0 : i32
    return %arg0, %c0_i32 : i32, i32
  }
}

</mosaic_0001>

<llo_original>
// kernel: tpu_custom_call.1
$region0: #{tpu_custom_call.1}
  #allocation0 [shape = 'u32[]', space=smem, size = 0x4, offset = 0x4, fixed_abs, tag = 'smem constant byte address 0x4 - core index']
  #allocation1 [shape = 'u32[144,128]{1,0:T(1,128)}', space=vmem, size = 0x12000, scoped, tag = 'internal scratch']
  #allocation2 [shape = 'f32[8,256]{1,0:T(8,128)}', space=vmem, size = 0x2000, scoped, tag = 'scratch operand']
  %s0 = inlined_call_operand.hbm [shape: f32[8,128], index: 0, kind: input, shape index: {}]
  %s1 = inlined_call_operand.hbm [shape: f32[8,128], index: 1, kind: input, shape index: {}]
  %s2 = inlined_call_operand.hbm [shape: f32[8,128], index: 2, kind: input, shape index: {}]
  %s3 = inlined_call_operand.hbm [shape: f32[128,128], index: 3, kind: input, shape index: {}]
  %s4 = inlined_call_operand.hbm [shape: f32[128,128], index: 4, kind: input, shape index: {}]
  %s5 = inlined_call_operand.vmem [shape: f32[1,128], index: 5, kind: input, shape index: {}]
  %s6 = inlined_call_operand.hbm [shape: f32[128,256], index: 6, kind: input, shape index: {}]
  %s7 = inlined_call_operand.vmem [shape: f32[1,256], index: 7, kind: input, shape index: {}]
  %s8 = inlined_call_operand.hbm [shape: f32[256,128], index: 8, kind: input, shape index: {}]
  %s9 = inlined_call_operand.vmem [shape: f32[1,128], index: 9, kind: input, shape index: {}]
  %s10 = inlined_call_operand.hbm [shape: f32[128,128], index: 10, kind: input, shape index: {}]
  %s11 = inlined_call_operand.vmem [shape: f32[1,128], index: 11, kind: input, shape index: {}]
  %s12 = inlined_call_operand.hbm [shape: f32[8,128], index: 12, kind: output, shape index: {0}]
  %s13 = inlined_call_operand.hbm [shape: f32[8,128], index: 13, kind: output, shape index: {1}]
  %s14 = inlined_call_operand.hbm [shape: f32[8,128], index: 14, kind: output, shape index: {2}]
  %15 = xla_tuple %s12, %s13, %s14
  %s16 = sld [smem:[#allocation0]]
  $region106: #{tpu_custom_call.1} parent=0
    _
  %s18 = ssub.s32 1, %s16
  %s19 = scalar_select 0, %s18, %s16
  $region1: #{tpu_custom_call.1} parent=0
    #allocation3 [shape = 'u8[4096]{0}', space=vmem, size = 0x1000, scoped, tag = 'input window, operand 0, single buffered']
    #allocation4 [shape = 's32[1]{0}', space=sflag, size = 0x4, scoped, tag = 'scoped memory for tpu_custom_call.1']
    #allocation5 [shape = 's32[1]{0}', space=sflag, size = 0x4, scoped, tag = 'scoped memory for tpu_custom_call.1']
    #allocation6 [shape = 'u8[4096]{0}', space=vmem, size = 0x1000, scoped, tag = 'input window, operand 1, single buffered']
    #allocation7 [shape = 's32[1]{0}', space=sflag, size = 0x4, scoped, tag = 'scoped memory for tpu_custom_call.1']
    #allocation8 [shape = 'u8[4096]{0}', space=vmem, size = 0x1000, scoped, tag = 'input window, operand 2, single buffered']
    #allocation9 [shape = 'u8[65536]{0}', space=vmem, size = 0x10000, scoped, tag = 'input window, operand 3, single buffered']
    #allocation10 [shape = 's32[1]{0}', space=sflag, size = 0x4, scoped, tag = 'scoped memory for tpu_custom_call.1']
    #allocation11 [shape = 'u8[65536]{0}', space=vmem, size = 0x10000, scoped, tag = 'input window, operand 4, single buffered']
    #allocation12 [shape = 'u8[131072]{0}', space=vmem, size = 0x20000, scoped, tag = 'input window, operand 6, single buffered']
    #allocation13 [shape = 's32[1]{0}', space=sflag, size = 0x4, scoped, tag = 'scoped memory for tpu_custom_call.1']
    #allocation14 [shape = 'u8[131072]{0}', space=vmem, size = 0x20000, scoped, tag = 'input window, operand 8, single buffered']
    #allocation15 [shape = 'u8[65536]{0}', space=vmem, size = 0x10000, scoped, tag = 'input window, operand 10, single buffered']
    #allocation16 [shape = 's32[1]{0}', space=sflag, size = 0x4, scoped, tag = 'scoped memory for tpu_custom_call.1']
    #allocation17 [shape = 'u8[4096]{0}', space=vmem, size = 0x1000, scoped, tag = 'output window, operand 0, single buffered']
    #allocation18 [shape = 'u8[4096]{0}', space=vmem, size = 0x1000, scoped, tag = 'output window, operand 1, single buffered']
    #allocation19 [shape = 's32[1]{0}', space=sflag, size = 0x4, scoped, tag = 'scoped memory for tpu_custom_call.1']
    #allocation20 [shape = 'u8[4096]{0}', space=vmem, size = 0x1000, scoped, tag = 'output window, operand 2, single buffered']
    %20 = vsyncpa [#allocation4], 0
    %21 = vsyncpa [#allocation7], 0
    %22 = vsyncpa [#allocation10], 0
    %23 = vsyncpa [#allocation13], 0
    %24 = vsyncpa [#allocation16], 0
    %25 = vsyncpa [#allocation5], 0
    %26 = vsyncpa [#allocation19], 0
    // Predicated region
    $region2: #{tpu_custom_call.1} parent=1 // pred_check
      _
    $region3: #{tpu_custom_call.1} parent=1 // pred_check_branch
      %28 = sbr.rel (0) target = $region5
    $region4: #{tpu_custom_call.1} parent=1 // pred_region
      %s30 = ssub.s32 128, 128
      %31 = vsyncadd [#allocation4], %s30
      %s33 = sshll.u32 [#allocation3], 4
      %s34 = int_to_ptr.vmem [resolvable:$true] %s33
      %36 = dma.hbm_to_vmem [thread:$0]  %s0, 128, %s34, [#allocation4]
    $region5: #{tpu_custom_call.1} parent=1 // pred_fallthru
      _
    // Predicated region
    $region6: #{tpu_custom_call.1} parent=1 // pred_check
      _
    $region7: #{tpu_custom_call.1} parent=1 // pred_check_branch
      %38 = sbr.rel (0) target = $region9
    $region8: #{tpu_custom_call.1} parent=1 // pred_region
      %s40 = ssub.s32 128, 128
      %41 = vsyncadd [#allocation7], %s40
      %s43 = sshll.u32 [#allocation6], 4
      %s44 = int_to_ptr.vmem [resolvable:$true] %s43
      %46 = dma.hbm_to_vmem [thread:$0]  %s1, 128, %s44, [#allocation7]
    $region9: #{tpu_custom_call.1} parent=1 // pred_fallthru
      _
    // Predicated region
    $region10: #{tpu_custom_call.1} parent=1 // pred_check
      _
    $region11: #{tpu_custom_call.1} parent=1 // pred_check_branch
      %48 = sbr.rel (0) target = $region13
    $region12: #{tpu_custom_call.1} parent=1 // pred_region
      %s50 = ssub.s32 128, 128
      %51 = vsyncadd [#allocation7], %s50
      %s53 = sshll.u32 [#allocation8], 4
      %s54 = int_to_ptr.vmem [resolvable:$true] %s53
      %56 = dma.hbm_to_vmem [thread:$0]  %s2, 128, %s54, [#allocation7]
    $region13: #{tpu_custom_call.1} parent=1 // pred_fallthru
      _
    // Predicated region
    $region14: #{tpu_custom_call.1} parent=1 // pred_check
      _
    $region15: #{tpu_custom_call.1} parent=1 // pred_check_branch
      %58 = sbr.rel (0) target = $region17
    $region16: #{tpu_custom_call.1} parent=1 // pred_region
      %s60 = ssub.s32 2048, 2048
      %61 = vsyncadd [#allocation10], %s60
      %s62 = sshll.u32 [#allocation9], 4
      %s63 = int_to_ptr.vmem [resolvable:$true] %s62
      %68 = dma.hbm_to_vmem [thread:$0]  %s3, 2048, %s63, [#allocation10], 128, 128, 8
    $region17: #{tpu_custom_call.1} parent=1 // pred_fallthru
      _
    // Predicated region
    $region18: #{tpu_custom_call.1} parent=1 // pred_check
      _
    $region19: #{tpu_custom_call.1} parent=1 // pred_check_branch
      %70 = sbr.rel (0) target = $region21
    $region20: #{tpu_custom_call.1} parent=1 // pred_region
      %s72 = ssub.s32 2048, 2048
      %73 = vsyncadd [#allocation10], %s72
      %s74 = sshll.u32 [#allocation11], 4
      %s75 = int_to_ptr.vmem [resolvable:$true] %s74
      %80 = dma.hbm_to_vmem [thread:$0]  %s4, 2048, %s75, [#allocation10], 128, 128, 8
    $region21: #{tpu_custom_call.1} parent=1 // pred_fallthru
      _
    // Predicated region
    $region22: #{tpu_custom_call.1} parent=1 // pred_check
      _
    $region23: #{tpu_custom_call.1} parent=1 // pred_check_branch
      %82 = sbr.rel (0) target = $region25
    $region24: #{tpu_custom_call.1} parent=1 // pred_region
      _
    $region25: #{tpu_custom_call.1} parent=1 // pred_fallthru
      _
    // Predicated region
    $region26: #{tpu_custom_call.1} parent=1 // pred_check
      _
    $region27: #{tpu_custom_call.1} parent=1 // pred_check_branch
      %84 = sbr.rel (0) target = $region29
    $region28: #{tpu_custom_call.1} parent=1 // pred_region
      %s86 = ssub.s32 4096, 4096
      %87 = vsyncadd [#allocation13], %s86
      %s88 = sshll.u32 [#allocation12], 4
      %s89 = int_to_ptr.vmem [resolvable:$true] %s88
      %94 = dma.hbm_to_vmem [thread:$0]  %s6, 4096, %s89, [#allocation13], 256, 256, 16
    $region29: #{tpu_custom_call.1} parent=1 // pred_fallthru
      _
    // Predicated region
    $region30: #{tpu_custom_call.1} parent=1 // pred_check
      _
    $region31: #{tpu_custom_call.1} parent=1 // pred_check_branch
      %96 = sbr.rel (0) target = $region33
    $region32: #{tpu_custom_call.1} parent=1 // pred_region
      _
    $region33: #{tpu_custom_call.1} parent=1 // pred_fallthru
      _
    // Predicated region
    $region34: #{tpu_custom_call.1} parent=1 // pred_check
      _
    $region35: #{tpu_custom_call.1} parent=1 // pred_check_branch
      %98 = sbr.rel (0) target = $region37
    $region36: #{tpu_custom_call.1} parent=1 // pred_region
      %s100 = ssub.s32 4096, 4096
      %101 = vsyncadd [#allocation13], %s100
      %s102 = sshll.u32 [#allocation14], 4
      %s103 = int_to_ptr.vmem [resolvable:$true] %s102
      %108 = dma.hbm_to_vmem [thread:$0]  %s8, 4096, %s103, [#allocation13], 128, 128, 8
    $region37: #{tpu_custom_call.1} parent=1 // pred_fallthru
      _
    // Predicated region
    $region38: #{tpu_custom_call.1} parent=1 // pred_check
      _
    $region39: #{tpu_custom_call.1} parent=1 // pred_check_branch
      %110 = sbr.rel (0) target = $region41
    $region40: #{tpu_custom_call.1} parent=1 // pred_region
      _
    $region41: #{tpu_custom_call.1} parent=1 // pred_fallthru
      _
    // Predicated region
    $region42: #{tpu_custom_call.1} parent=1 // pred_check
      _
    $region43: #{tpu_custom_call.1} parent=1 // pred_check_branch
      %112 = sbr.rel (0) target = $region45
    $region44: #{tpu_custom_call.1} parent=1 // pred_region
      %s114 = ssub.s32 2048, 2048
      %115 = vsyncadd [#allocation16], %s114
      %s116 = sshll.u32 [#allocation15], 4
      %s117 = int_to_ptr.vmem [resolvable:$true] %s116
      %122 = dma.hbm_to_vmem [thread:$0]  %s10, 2048, %s117, [#allocation16], 128, 128, 8
    $region45: #{tpu_custom_call.1} parent=1 // pred_fallthru
      _
    // Predicated region
    $region46: #{tpu_custom_call.1} parent=1 // pred_check
      _
    $region47: #{tpu_custom_call.1} parent=1 // pred_check_branch
      %124 = sbr.rel (0) target = $region49
    $region48: #{tpu_custom_call.1} parent=1 // pred_region
      _
    $region49: #{tpu_custom_call.1} parent=1 // pred_fallthru
      _
    // Predicated region
    $region50: #{tpu_custom_call.1} parent=1 // pred_check
      _
    $region51: #{tpu_custom_call.1} parent=1 // pred_check_branch
      %126 = sbr.rel (0) target = $region53
    $region52: #{tpu_custom_call.1} parent=1 // pred_region
      %127 = dma.done [#allocation4], 128
    $region53: #{tpu_custom_call.1} parent=1 // pred_fallthru
      _
    // Predicated region
    $region54: #{tpu_custom_call.1} parent=1 // pred_check
      _
    $region55: #{tpu_custom_call.1} parent=1 // pred_check_branch
      %129 = sbr.rel (0) target = $region57
    $region56: #{tpu_custom_call.1} parent=1 // pred_region
      %130 = dma.done [#allocation7], 128
    $region57: #{tpu_custom_call.1} parent=1 // pred_fallthru
      _
    // Predicated region
    $region58: #{tpu_custom_call.1} parent=1 // pred_check
      _
    $region59: #{tpu_custom_call.1} parent=1 // pred_check_branch
      %132 = sbr.rel (0) target = $region61
    $region60: #{tpu_custom_call.1} parent=1 // pred_region
      %133 = dma.done [#allocation7], 128
    $region61: #{tpu_custom_call.1} parent=1 // pred_fallthru
      _
    // Predicated region
    $region62: #{tpu_custom_call.1} parent=1 // pred_check
      _
    $region63: #{tpu_custom_call.1} parent=1 // pred_check_branch
      %135 = sbr.rel (0) target = $region65
    $region64: #{tpu_custom_call.1} parent=1 // pred_region
      %136 = dma.done [#allocation10], 2048
    $region65: #{tpu_custom_call.1} parent=1 // pred_fallthru
      _
    // Predicated region
    $region66: #{tpu_custom_call.1} parent=1 // pred_check
      _
    $region67: #{tpu_custom_call.1} parent=1 // pred_check_branch
      %138 = sbr.rel (0) target = $region69
    $region68: #{tpu_custom_call.1} parent=1 // pred_region
      %139 = dma.done [#allocation10], 2048
    $region69: #{tpu_custom_call.1} parent=1 // pred_fallthru
      _
    // Predicated region
    $region70: #{tpu_custom_call.1} parent=1 // pred_check
      _
    $region71: #{tpu_custom_call.1} parent=1 // pred_check_branch
      %141 = sbr.rel (0) target = $region73
    $region72: #{tpu_custom_call.1} parent=1 // pred_region
      %142 = dma.done [#allocation13], 4096
    $region73: #{tpu_custom_call.1} parent=1 // pred_fallthru
      _
    // Predicated region
    $region74: #{tpu_custom_call.1} parent=1 // pred_check
      _
    $region75: #{tpu_custom_call.1} parent=1 // pred_check_branch
      %144 = sbr.rel (0) target = $region77
    $region76: #{tpu_custom_call.1} parent=1 // pred_region
      %145 = dma.done [#allocation13], 4096
    $region77: #{tpu_custom_call.1} parent=1 // pred_fallthru
      _
    // Predicated region
    $region78: #{tpu_custom_call.1} parent=1 // pred_check
      _
    $region79: #{tpu_custom_call.1} parent=1 // pred_check_branch
      %147 = sbr.rel (0) target = $region81
    $region80: #{tpu_custom_call.1} parent=1 // pred_region
      %148 = dma.done [#allocation16], 2048
    $region81: #{tpu_custom_call.1} parent=1 // pred_fallthru
      _
    %v149 = vld [vmem:[#allocation3] sm:$0xff]
    %v150 = vld [vmem:[#allocation6] sm:$0xff]
    %v151 = vld [vmem:[#allocation9] sm:$0xff]
    %v152 = vld [vmem:[#allocation9 + $0x8] sm:$0xff]
    %v153 = vld [vmem:[#allocation9 + $0x10] sm:$0xff]
    %v154 = vld [vmem:[#allocation9 + $0x18] sm:$0xff]
    %v155 = vld [vmem:[#allocation9 + $0x20] sm:$0xff]
    %v156 = vld [vmem:[#allocation9 + $0x28] sm:$0xff]
    %v157 = vld [vmem:[#allocation9 + $0x30] sm:$0xff]
    %v158 = vld [vmem:[#allocation9 + $0x38] sm:$0xff]
    %v159 = vld [vmem:[#allocation9 + $0x40] sm:$0xff]
    %v160 = vld [vmem:[#allocation9 + $0x48] sm:$0xff]
    %v161 = vld [vmem:[#allocation9 + $0x50] sm:$0xff]
    %v162 = vld [vmem:[#allocation9 + $0x58] sm:$0xff]
    %v163 = vld [vmem:[#allocation9 + $0x60] sm:$0xff]
    %v164 = vld [vmem:[#allocation9 + $0x68] sm:$0xff]
    %v165 = vld [vmem:[#allocation9 + $0x70] sm:$0xff]
    %v166 = vld [vmem:[#allocation9 + $0x78] sm:$0xff]
    %v167 = vld [vmem:[#allocation11] sm:$0xff]
    %v168 = vld [vmem:[#allocation11 + $0x8] sm:$0xff]
    %v169 = vld [vmem:[#allocation11 + $0x10] sm:$0xff]
    %v170 = vld [vmem:[#allocation11 + $0x18] sm:$0xff]
    %v171 = vld [vmem:[#allocation11 + $0x20] sm:$0xff]
    %v172 = vld [vmem:[#allocation11 + $0x28] sm:$0xff]
    %v173 = vld [vmem:[#allocation11 + $0x30] sm:$0xff]
    %v174 = vld [vmem:[#allocation11 + $0x38] sm:$0xff]
    %v175 = vld [vmem:[#allocation11 + $0x40] sm:$0xff]
    %v176 = vld [vmem:[#allocation11 + $0x48] sm:$0xff]
    %v177 = vld [vmem:[#allocation11 + $0x50] sm:$0xff]
    %v178 = vld [vmem:[#allocation11 + $0x58] sm:$0xff]
    %v179 = vld [vmem:[#allocation11 + $0x60] sm:$0xff]
    %v180 = vld [vmem:[#allocation11 + $0x68] sm:$0xff]
    %v181 = vld [vmem:[#allocation11 + $0x70] sm:$0xff]
    %v182 = vld [vmem:[#allocation11 + $0x78] sm:$0xff]
    %183 = vmatprep.subr.mxu0 0.0
    %184 = vmatpush1.msra.mxu0 %v167
    %185 = vmatprep.subr.mxu0 0.0
    %186 = vmatpush1.msra.mxu0 %v168
    %187 = vmatprep.subr.mxu0 0.0
    %188 = vmatpush1.msra.mxu0 %v169
    %189 = vmatprep.subr.mxu0 0.0
    %190 = vmatpush1.msra.mxu0 %v170
    %191 = vmatprep.subr.mxu0 0.0
    %192 = vmatpush1.msra.mxu0 %v171
    %193 = vmatprep.subr.mxu0 0.0
    %194 = vmatpush1.msra.mxu0 %v172
    %195 = vmatprep.subr.mxu0 0.0
    %196 = vmatpush1.msra.mxu0 %v173
    %197 = vmatprep.subr.mxu0 0.0
    %198 = vmatpush1.msra.mxu0 %v174
    %199 = vmatprep.subr.mxu0 0.0
    %200 = vmatpush1.msra.mxu0 %v175
    %201 = vmatprep.subr.mxu0 0.0
    %202 = vmatpush1.msra.mxu0 %v176
    %203 = vmatprep.subr.mxu0 0.0
    %204 = vmatpush1.msra.mxu0 %v177
    %205 = vmatprep.subr.mxu0 0.0
    %206 = vmatpush1.msra.mxu0 %v178
    %207 = vmatprep.subr.mxu0 0.0
    %208 = vmatpush1.msra.mxu0 %v179
    %209 = vmatprep.subr.mxu0 0.0
    %210 = vmatpush1.msra.mxu0 %v180
    %211 = vmatprep.subr.mxu0 0.0
    %212 = vmatpush1.msra.mxu0 %v181
    %213 = vmatprep.subr.mxu0 0.0
    %214 = vmatpush1.msra.mxu0 %v182
    %215 = vmatprep.subr.mxu0 0.0
    %216 = vmatpush1.msra.mxu0 0.0
    %217 = vmatprep.subr.mxu0 0.0
    %218 = vmatpush1.msra.mxu0 0.0
    %219 = vmatprep.subr.mxu0 0.0
    %220 = vmatpush1.msra.mxu0 0.0
    %221 = vmatprep.subr.mxu0 0.0
    %222 = vmatpush1.msra.mxu0 0.0
    %223 = vmatprep.subr.mxu0 0.0
    %224 = vmatpush1.msra.mxu0 0.0
    %225 = vmatprep.subr.mxu0 0.0
    %226 = vmatpush1.msra.mxu0 0.0
    %227 = vmatprep.subr.mxu0 0.0
    %228 = vmatpush1.msra.mxu0 0.0
    %229 = vmatprep.subr.mxu0 0.0
    %230 = vmatpush1.msra.mxu0 0.0
    %231 = vmatprep.subr.mxu0 0.0
    %232 = vmatpush1.msra.mxu0 0.0
    %233 = vmatprep.subr.mxu0 0.0
    %234 = vmatpush1.msra.mxu0 0.0
    %235 = vmatprep.subr.mxu0 0.0
    %236 = vmatpush1.msra.mxu0 0.0
    %237 = vmatprep.subr.mxu0 0.0
    %238 = vmatpush1.msra.mxu0 0.0
    %239 = vmatprep.subr.mxu0 0.0
    %240 = vmatpush1.msra.mxu0 0.0
    %241 = vmatprep.subr.mxu0 0.0
    %242 = vmatpush1.msra.mxu0 0.0
    %243 = vmatprep.subr.mxu0 0.0
    %244 = vmatpush1.msra.mxu0 0.0
    %245 = vmatprep.subr.mxu0 0.0
    %246 = vmatpush1.msra.mxu0 0.0
    %247 = vmatprep.mubr.f32.mxu0 0.0
    %248 = vmatmul.mubr.f32.gmra.mrb[0].mxu0 %v150
    %v249 = vpop.f32.mrb[0].mxu0
    %v250 = vadd.f32 0.0, %v249
    %v251 = vpop.f32.mrb[0].mxu0
    %252 = vdwg.mxu0
    %253 = vmatprep.subr.mxu0 0.0
    %254 = vmatpush1.msra.mxu0 %v151
    %255 = vmatprep.subr.mxu0 0.0
    %256 = vmatpush1.msra.mxu0 %v152
    %257 = vmatprep.subr.mxu0 0.0
    %258 = vmatpush1.msra.mxu0 %v153
    %259 = vmatprep.subr.mxu0 0.0
    %260 = vmatpush1.msra.mxu0 %v154
    %261 = vmatprep.subr.mxu0 0.0
    %262 = vmatpush1.msra.mxu0 %v155
    %263 = vmatprep.subr.mxu0 0.0
    %264 = vmatpush1.msra.mxu0 %v156
    %265 = vmatprep.subr.mxu0 0.0
    %266 = vmatpush1.msra.mxu0 %v157
    %267 = vmatprep.subr.mxu0 0.0
    %268 = vmatpush1.msra.mxu0 %v158
    %269 = vmatprep.subr.mxu0 0.0
    %270 = vmatpush1.msra.mxu0 %v159
    %271 = vmatprep.subr.mxu0 0.0
    %272 = vmatpush1.msra.mxu0 %v160
    %273 = vmatprep.subr.mxu0 0.0
    %274 = vmatpush1.msra.mxu0 %v161
    %275 = vmatprep.subr.mxu0 0.0
    %276 = vmatpush1.msra.mxu0 %v162
    %277 = vmatprep.subr.mxu0 0.0
    %278 = vmatpush1.msra.mxu0 %v163
    %279 = vmatprep.subr.mxu0 0.0
    %280 = vmatpush1.msra.mxu0 %v164
    %281 = vmatprep.subr.mxu0 0.0
    %282 = vmatpush1.msra.mxu0 %v165
    %283 = vmatprep.subr.mxu0 0.0
    %284 = vmatpush1.msra.mxu0 %v166
    %285 = vmatprep.subr.mxu0 0.0
    %286 = vmatpush1.msra.mxu0 0.0
    %287 = vmatprep.subr.mxu0 0.0
    %288 = vmatpush1.msra.mxu0 0.0
    %289 = vmatprep.subr.mxu0 0.0
    %290 = vmatpush1.msra.mxu0 0.0
    %291 = vmatprep.subr.mxu0 0.0
    %292 = vmatpush1.msra.mxu0 0.0
    %293 = vmatprep.subr.mxu0 0.0
    %294 = vmatpush1.msra.mxu0 0.0
    %295 = vmatprep.subr.mxu0 0.0
    %296 = vmatpush1.msra.mxu0 0.0
    %297 = vmatprep.subr.mxu0 0.0
    %298 = vmatpush1.msra.mxu0 0.0
    %299 = vmatprep.subr.mxu0 0.0
    %300 = vmatpush1.msra.mxu0 0.0
    %301 = vmatprep.subr.mxu0 0.0
    %302 = vmatpush1.msra.mxu0 0.0
    %303 = vmatprep.subr.mxu0 0.0
    %304 = vmatpush1.msra.mxu0 0.0
    %305 = vmatprep.subr.mxu0 0.0
    %306 = vmatpush1.msra.mxu0 0.0
    %307 = vmatprep.subr.mxu0 0.0
    %308 = vmatpush1.msra.mxu0 0.0
    %309 = vmatprep.subr.mxu0 0.0
    %310 = vmatpush1.msra.mxu0 0.0
    %311 = vmatprep.subr.mxu0 0.0
    %312 = vmatpush1.msra.mxu0 0.0
    %313 = vmatprep.subr.mxu0 0.0
    %314 = vmatpush1.msra.mxu0 0.0
    %315 = vmatprep.subr.mxu0 0.0
    %316 = vmatpush1.msra.mxu0 0.0
    %317 = vmatprep.mubr.f32.mxu0 0.0
    %318 = vmatmul.mubr.f32.gmra.mrb[0].mxu0 %v149
    %v319 = vpop.f32.mrb[0].mxu0
    %v320 = vadd.f32 %v250, %v319
    %v321 = vpop.f32.mrb[0].mxu0
    %322 = vdwg.mxu0
    %v323 = vld [vmem:[%s5] sm:$0x1]
    %v325 = vlaneseq
    %v326 = vshrl.u32 %v325, 7
    %v327 = vsub.s32 0, %v326
    %v328 = vrot.slane %v323, %v327
    %v330 = vadd.f32 %v320, %v328
    %v331 = vmax.f32 %v330, 0.0
    %vm332 = vcmp.ne.f32.partialorder %v330, %v330
    %v333 = vadd.f32 %v330, 0.0
    %v334 = vand.u32 2147483647, %v330
    %v335 = vsub.f32 0.0, %v334
    %v336 = vmul.f32 %v335, 1.442695
    %v337 = vpow.pop %v336
    %v338 = vadd.f32 %v337, 1.0
    %v339 = vlog2.pop %v338
    %v340 = vmul.f32 %v339, 0.6931472
    %v341 = vmul.f32 -0.5, %v337
    %v342 = vadd.f32 %v341, 1.0
    %v343 = vmul.f32 %v342, %v337
    %v344 = vand.u32 2147483647, %v337
    %vm345 = vcmp.lt.f32.partialorder %v344, 0.0004427343
    %v346 = vsel %vm345, %v343, %v340
    %v347 = vadd.f32 %v331, %v346
    %v348 = vsel %vm332, %v333, %v347
    %v349 = vld [vmem:[#allocation12] sm:$0xff]
    %v350 = vld [vmem:[#allocation12 + $0x8] sm:$0xff]
    %v351 = vld [vmem:[#allocation12 + $0x10] sm:$0xff]
    %v352 = vld [vmem:[#allocation12 + $0x18] sm:$0xff]
    %v353 = vld [vmem:[#allocation12 + $0x20] sm:$0xff]
    %v354 = vld [vmem:[#allocation12 + $0x28] sm:$0xff]
    %v355 = vld [vmem:[#allocation12 + $0x30] sm:$0xff]
    %v356 = vld [vmem:[#allocation12 + $0x38] sm:$0xff]
    %v357 = vld [vmem:[#allocation12 + $0x40] sm:$0xff]
    %v358 = vld [vmem:[#allocation12 + $0x48] sm:$0xff]
    %v359 = vld [vmem:[#allocation12 + $0x50] sm:$0xff]
    %v360 = vld [vmem:[#allocation12 + $0x58] sm:$0xff]
    %v361 = vld [vmem:[#allocation12 + $0x60] sm:$0xff]
    %v362 = vld [vmem:[#allocation12 + $0x68] sm:$0xff]
    %v363 = vld [vmem:[#allocation12 + $0x70] sm:$0xff]
    %v364 = vld [vmem:[#allocation12 + $0x78] sm:$0xff]
    %v365 = vld [vmem:[#allocation12 + $0x80] sm:$0xff]
    %v366 = vld [vmem:[#allocation12 + $0x88] sm:$0xff]
    %v367 = vld [vmem:[#allocation12 + $0x90] sm:$0xff]
    %v368 = vld [vmem:[#allocation12 + $0x98] sm:$0xff]
    %v369 = vld [vmem:[#allocation12 + $0xa0] sm:$0xff]
    %v370 = vld [vmem:[#allocation12 + $0xa8] sm:$0xff]
    %v371 = vld [vmem:[#allocation12 + $0xb0] sm:$0xff]
    %v372 = vld [vmem:[#allocation12 + $0xb8] sm:$0xff]
    %v373 = vld [vmem:[#allocation12 + $0xc0] sm:$0xff]
    %v374 = vld [vmem:[#allocation12 + $0xc8] sm:$0xff]
    %v375 = vld [vmem:[#allocation12 + $0xd0] sm:$0xff]
    %v376 = vld [vmem:[#allocation12 + $0xd8] sm:$0xff]
    %v377 = vld [vmem:[#allocation12 + $0xe0] sm:$0xff]
    %v378 = vld [vmem:[#allocation12 + $0xe8] sm:$0xff]
    %v379 = vld [vmem:[#allocation12 + $0xf0] sm:$0xff]
    %v380 = vld [vmem:[#allocation12 + $0xf8] sm:$0xff]
    %v381 = vld [vmem:[%s7] sm:$0x3]
    %v383 = vlaneseq
    %v384 = vshrl.u32 %v383, 7
    %v385 = vsub.s32 0, %v384
    %v386 = vrot.slane %v381, %v385
    %v387 = vlaneseq
    %v388 = vshrl.u32 %v387, 7
    %v389 = vsub.s32 1, %v388
    %v390 = vrot.slane %v381, %v389
    %393 = vmatprep.subr.mxu0 %v350
    %394 = vmatpush1.msra.mxu0 %v349
    %395 = vmatprep.subr.mxu0 %v352
    %396 = vmatpush1.msra.mxu0 %v351
    %397 = vmatprep.subr.mxu0 %v354
    %398 = vmatpush1.msra.mxu0 %v353
    %399 = vmatprep.subr.mxu0 %v356
    %400 = vmatpush1.msra.mxu0 %v355
    %401 = vmatprep.subr.mxu0 %v358
    %402 = vmatpush1.msra.mxu0 %v357
    %403 = vmatprep.subr.mxu0 %v360
    %404 = vmatpush1.msra.mxu0 %v359
    %405 = vmatprep.subr.mxu0 %v362
    %406 = vmatpush1.msra.mxu0 %v361
    %407 = vmatprep.subr.mxu0 %v364
    %408 = vmatpush1.msra.mxu0 %v363
    %409 = vmatprep.subr.mxu0 %v366
    %410 = vmatpush1.msra.mxu0 %v365
    %411 = vmatprep.subr.mxu0 %v368
    %412 = vmatpush1.msra.mxu0 %v367
    %413 = vmatprep.subr.mxu0 %v370
    %414 = vmatpush1.msra.mxu0 %v369
    %415 = vmatprep.subr.mxu0 %v372
    %416 = vmatpush1.msra.mxu0 %v371
    %417 = vmatprep.subr.mxu0 %v374
    %418 = vmatpush1.msra.mxu0 %v373
    %419 = vmatprep.subr.mxu0 %v376
    %420 = vmatpush1.msra.mxu0 %v375
    %421 = vmatprep.subr.mxu0 %v378
    %422 = vmatpush1.msra.mxu0 %v377
    %423 = vmatprep.subr.mxu0 %v380
    %424 = vmatpush1.msra.mxu0 %v379
    %425 = vmatprep.subr.mxu0 0.0
    %426 = vmatpush1.msra.mxu0 0.0
    %427 = vmatprep.subr.mxu0 0.0
    %428 = vmatpush1.msra.mxu0 0.0
    %429 = vmatprep.subr.mxu0 0.0
    %430 = vmatpush1.msra.mxu0 0.0
    %431 = vmatprep.subr.mxu0 0.0
    %432 = vmatpush1.msra.mxu0 0.0
    %433 = vmatprep.subr.mxu0 0.0
    %434 = vmatpush1.msra.mxu0 0.0
    %435 = vmatprep.subr.mxu0 0.0
    %436 = vmatpush1.msra.mxu0 0.0
    %437 = vmatprep.subr.mxu0 0.0
    %438 = vmatpush1.msra.mxu0 0.0
    %439 = vmatprep.subr.mxu0 0.0
    %440 = vmatpush1.msra.mxu0 0.0
    %441 = vmatprep.subr.mxu0 0.0
    %442 = vmatpush1.msra.mxu0 0.0
    %443 = vmatprep.subr.mxu0 0.0
    %444 = vmatpush1.msra.mxu0 0.0
    %445 = vmatprep.subr.mxu0 0.0
    %446 = vmatpush1.msra.mxu0 0.0
    %447 = vmatprep.subr.mxu0 0.0
    %448 = vmatpush1.msra.mxu0 0.0
    %449 = vmatprep.subr.mxu0 0.0
    %450 = vmatpush1.msra.mxu0 0.0
    %451 = vmatprep.subr.mxu0 0.0
    %452 = vmatpush1.msra.mxu0 0.0
    %453 = vmatprep.subr.mxu0 0.0
    %454 = vmatpush1.msra.mxu0 0.0
    %455 = vmatprep.subr.mxu0 0.0
    %456 = vmatpush1.msra.mxu0 0.0
    %457 = vmatprep.mubr.f32.mxu0 0.0
    %458 = vmatmul.mubr.f32.gmra.mrb[0].mxu0 %v348
    %v459 = vpop.f32.mrb[0].mxu0
    %v460 = vadd.f32 %v386, %v459
    %v461 = vpop.f32.mrb[0].mxu0
    %v462 = vadd.f32 %v390, %v461
    %463 = vdwg.mxu0
    %v464 = vld [vmem:[#allocation8] sm:$0xff]
    %v465 = vmul.f32 %v462, 0.5
    %v466 = vmul.f32 %v465, 1.442695
    %v467 = vpow.pop %v466
    %v468 = vmul.f32 %v464, %v467
    %v469 = vadd.f32 %v460, %v468
    %470 = vst [vmem:[#allocation2] sm:$0xff] %v469
    %471 = vst [vmem:[#allocation2 + $0x8] sm:$0xff] %v150
    %v472 = vld [vmem:[#allocation2] sm:$0xff]
    %v473 = vld [vmem:[#allocation2 + $0x8] sm:$0xff]
    %v474 = vld [vmem:[#allocation14] sm:$0xff]
    %v475 = vld [vmem:[#allocation14 + $0x8] sm:$0xff]
    %v476 = vld [vmem:[#allocation14 + $0x10] sm:$0xff]
    %v477 = vld [vmem:[#allocation14 + $0x18] sm:$0xff]
    %v478 = vld [vmem:[#allocation14 + $0x20] sm:$0xff]
    %v479 = vld [vmem:[#allocation14 + $0x28] sm:$0xff]
    %v480 = vld [vmem:[#allocation14 + $0x30] sm:$0xff]
    %v481 = vld [vmem:[#allocation14 + $0x38] sm:$0xff]
    %v482 = vld [vmem:[#allocation14 + $0x40] sm:$0xff]
    %v483 = vld [vmem:[#allocation14 + $0x48] sm:$0xff]
    %v484 = vld [vmem:[#allocation14 + $0x50] sm:$0xff]
    %v485 = vld [vmem:[#allocation14 + $0x58] sm:$0xff]
    %v486 = vld [vmem:[#allocation14 + $0x60] sm:$0xff]
    %v487 = vld [vmem:[#allocation14 + $0x68] sm:$0xff]
    %v488 = vld [vmem:[#allocation14 + $0x70] sm:$0xff]
    %v489 = vld [vmem:[#allocation14 + $0x78] sm:$0xff]
    %v490 = vld [vmem:[#allocation14 + $0x80] sm:$0xff]
    %v491 = vld [vmem:[#allocation14 + $0x88] sm:$0xff]
    %v492 = vld [vmem:[#allocation14 + $0x90] sm:$0xff]
    %v493 = vld [vmem:[#allocation14 + $0x98] sm:$0xff]
    %v494 = vld [vmem:[#allocation14 + $0xa0] sm:$0xff]
    %v495 = vld [vmem:[#allocation14 + $0xa8] sm:$0xff]
    %v496 = vld [vmem:[#allocation14 + $0xb0] sm:$0xff]
    %v497 = vld [vmem:[#allocation14 + $0xb8] sm:$0xff]
    %v498 = vld [vmem:[#allocation14 + $0xc0] sm:$0xff]
    %v499 = vld [vmem:[#allocation14 + $0xc8] sm:$0xff]
    %v500 = vld [vmem:[#allocation14 + $0xd0] sm:$0xff]
    %v501 = vld [vmem:[#allocation14 + $0xd8] sm:$0xff]
    %v502 = vld [vmem:[#allocation14 + $0xe0] sm:$0xff]
    %v503 = vld [vmem:[#allocation14 + $0xe8] sm:$0xff]
    %v504 = vld [vmem:[#allocation14 + $0xf0] sm:$0xff]
    %v505 = vld [vmem:[#allocation14 + $0xf8] sm:$0xff]
    %v506 = vld [vmem:[%s9] sm:$0x1]
    %v508 = vlaneseq
    %v509 = vshrl.u32 %v508, 7
    %v510 = vsub.s32 0, %v509
    %v511 = vrot.slane %v506, %v510
    %513 = vmatprep.subr.mxu0 0.0
    %514 = vmatpush1.msra.mxu0 %v474
    %515 = vmatprep.subr.mxu0 0.0
    %516 = vmatpush1.msra.mxu0 %v475
    %517 = vmatprep.subr.mxu0 0.0
    %518 = vmatpush1.msra.mxu0 %v476
    %519 = vmatprep.subr.mxu0 0.0
    %520 = vmatpush1.msra.mxu0 %v477
    %521 = vmatprep.subr.mxu0 0.0
    %522 = vmatpush1.msra.mxu0 %v478
    %523 = vmatprep.subr.mxu0 0.0
    %524 = vmatpush1.msra.mxu0 %v479
    %525 = vmatprep.subr.mxu0 0.0
    %526 = vmatpush1.msra.mxu0 %v480
    %527 = vmatprep.subr.mxu0 0.0
    %528 = vmatpush1.msra.mxu0 %v481
    %529 = vmatprep.subr.mxu0 0.0
    %530 = vmatpush1.msra.mxu0 %v482
    %531 = vmatprep.subr.mxu0 0.0
    %532 = vmatpush1.msra.mxu0 %v483
    %533 = vmatprep.subr.mxu0 0.0
    %534 = vmatpush1.msra.mxu0 %v484
    %535 = vmatprep.subr.mxu0 0.0
    %536 = vmatpush1.msra.mxu0 %v485
    %537 = vmatprep.subr.mxu0 0.0
    %538 = vmatpush1.msra.mxu0 %v486
    %539 = vmatprep.subr.mxu0 0.0
    %540 = vmatpush1.msra.mxu0 %v487
    %541 = vmatprep.subr.mxu0 0.0
    %542 = vmatpush1.msra.mxu0 %v488
    %543 = vmatprep.subr.mxu0 0.0
    %544 = vmatpush1.msra.mxu0 %v489
    %545 = vmatprep.subr.mxu0 0.0
    %546 = vmatpush1.msra.mxu0 %v490
    %547 = vmatprep.subr.mxu0 0.0
    %548 = vmatpush1.msra.mxu0 %v491
    %549 = vmatprep.subr.mxu0 0.0
    %550 = vmatpush1.msra.mxu0 %v492
    %551 = vmatprep.subr.mxu0 0.0
    %552 = vmatpush1.msra.mxu0 %v493
    %553 = vmatprep.subr.mxu0 0.0
    %554 = vmatpush1.msra.mxu0 %v494
    %555 = vmatprep.subr.mxu0 0.0
    %556 = vmatpush1.msra.mxu0 %v495
    %557 = vmatprep.subr.mxu0 0.0
    %558 = vmatpush1.msra.mxu0 %v496
    %559 = vmatprep.subr.mxu0 0.0
    %560 = vmatpush1.msra.mxu0 %v497
    %561 = vmatprep.subr.mxu0 0.0
    %562 = vmatpush1.msra.mxu0 %v498
    %563 = vmatprep.subr.mxu0 0.0
    %564 = vmatpush1.msra.mxu0 %v499
    %565 = vmatprep.subr.mxu0 0.0
    %566 = vmatpush1.msra.mxu0 %v500
    %567 = vmatprep.subr.mxu0 0.0
    %568 = vmatpush1.msra.mxu0 %v501
    %569 = vmatprep.subr.mxu0 0.0
    %570 = vmatpush1.msra.mxu0 %v502
    %571 = vmatprep.subr.mxu0 0.0
    %572 = vmatpush1.msra.mxu0 %v503
    %573 = vmatprep.subr.mxu0 0.0
    %574 = vmatpush1.msra.mxu0 %v504
    %575 = vmatprep.subr.mxu0 0.0
    %576 = vmatpush1.msra.mxu0 %v505
    %577 = vmatprep.mubr.f32.mxu0 %v473
    %578 = vmatmul.mubr.f32.gmra.mrb[0].mxu0 %v472
    %v579 = vpop.f32.mrb[0].mxu0
    %v580 = vadd.f32 %v511, %v579
    %v581 = vpop.f32.mrb[0].mxu0
    %582 = vdwg.mxu0
    %v583 = vmax.f32 %v580, 0.0
    %vm584 = vcmp.ne.f32.partialorder %v580, %v580
    %v585 = vadd.f32 %v580, 0.0
    %v586 = vand.u32 2147483647, %v580
    %v587 = vsub.f32 0.0, %v586
    %v588 = vmul.f32 %v587, 1.442695
    %v589 = vpow.pop %v588
    %v590 = vadd.f32 %v589, 1.0
    %v591 = vlog2.pop %v590
    %v592 = vmul.f32 %v591, 0.6931472
    %v593 = vmul.f32 -0.5, %v589
    %v594 = vadd.f32 %v593, 1.0
    %v595 = vmul.f32 %v594, %v589
    %v596 = vand.u32 2147483647, %v589
    %vm597 = vcmp.lt.f32.partialorder %v596, 0.0004427343
    %v598 = vsel %vm597, %v595, %v592
    %v599 = vadd.f32 %v583, %v598
    %v600 = vsel %vm584, %v585, %v599
    %v601 = vld [vmem:[#allocation15] sm:$0xff]
    %v602 = vld [vmem:[#allocation15 + $0x8] sm:$0xff]
    %v603 = vld [vmem:[#allocation15 + $0x10] sm:$0xff]
    %v604 = vld [vmem:[#allocation15 + $0x18] sm:$0xff]
    %v605 = vld [vmem:[#allocation15 + $0x20] sm:$0xff]
    %v606 = vld [vmem:[#allocation15 + $0x28] sm:$0xff]
    %v607 = vld [vmem:[#allocation15 + $0x30] sm:$0xff]
    %v608 = vld [vmem:[#allocation15 + $0x38] sm:$0xff]
    %v609 = vld [vmem:[#allocation15 + $0x40] sm:$0xff]
    %v610 = vld [vmem:[#allocation15 + $0x48] sm:$0xff]
    %v611 = vld [vmem:[#allocation15 + $0x50] sm:$0xff]
    %v612 = vld [vmem:[#allocation15 + $0x58] sm:$0xff]
    %v613 = vld [vmem:[#allocation15 + $0x60] sm:$0xff]
    %v614 = vld [vmem:[#allocation15 + $0x68] sm:$0xff]
    %v615 = vld [vmem:[#allocation15 + $0x70] sm:$0xff]
    %v616 = vld [vmem:[#allocation15 + $0x78] sm:$0xff]
    %v617 = vld [vmem:[%s11] sm:$0x1]
    %v619 = vlaneseq
    %v620 = vshrl.u32 %v619, 7
    %v621 = vsub.s32 0, %v620
    %v622 = vrot.slane %v617, %v621
    %624 = vmatprep.subr.mxu0 0.0
    %625 = vmatpush1.msra.mxu0 %v601
    %626 = vmatprep.subr.mxu0 0.0
    %627 = vmatpush1.msra.mxu0 %v602
    %628 = vmatprep.subr.mxu0 0.0
    %629 = vmatpush1.msra.mxu0 %v603
    %630 = vmatprep.subr.mxu0 0.0
    %631 = vmatpush1.msra.mxu0 %v604
    %632 = vmatprep.subr.mxu0 0.0
    %633 = vmatpush1.msra.mxu0 %v605
    %634 = vmatprep.subr.mxu0 0.0
    %635 = vmatpush1.msra.mxu0 %v606
    %636 = vmatprep.subr.mxu0 0.0
    %637 = vmatpush1.msra.mxu0 %v607
    %638 = vmatprep.subr.mxu0 0.0
    %639 = vmatpush1.msra.mxu0 %v608
    %640 = vmatprep.subr.mxu0 0.0
    %641 = vmatpush1.msra.mxu0 %v609
    %642 = vmatprep.subr.mxu0 0.0
    %643 = vmatpush1.msra.mxu0 %v610
    %644 = vmatprep.subr.mxu0 0.0
    %645 = vmatpush1.msra.mxu0 %v611
    %646 = vmatprep.subr.mxu0 0.0
    %647 = vmatpush1.msra.mxu0 %v612
    %648 = vmatprep.subr.mxu0 0.0
    %649 = vmatpush1.msra.mxu0 %v613
    %650 = vmatprep.subr.mxu0 0.0
    %651 = vmatpush1.msra.mxu0 %v614
    %652 = vmatprep.subr.mxu0 0.0
    %653 = vmatpush1.msra.mxu0 %v615
    %654 = vmatprep.subr.mxu0 0.0
    %655 = vmatpush1.msra.mxu0 %v616
    %656 = vmatprep.subr.mxu0 0.0
    %657 = vmatpush1.msra.mxu0 0.0
    %658 = vmatprep.subr.mxu0 0.0
    %659 = vmatpush1.msra.mxu0 0.0
    %660 = vmatprep.subr.mxu0 0.0
    %661 = vmatpush1.msra.mxu0 0.0
    %662 = vmatprep.subr.mxu0 0.0
    %663 = vmatpush1.msra.mxu0 0.0
    %664 = vmatprep.subr.mxu0 0.0
    %665 = vmatpush1.msra.mxu0 0.0
    %666 = vmatprep.subr.mxu0 0.0
    %667 = vmatpush1.msra.mxu0 0.0
    %668 = vmatprep.subr.mxu0 0.0
    %669 = vmatpush1.msra.mxu0 0.0
    %670 = vmatprep.subr.mxu0 0.0
    %671 = vmatpush1.msra.mxu0 0.0
    %672 = vmatprep.subr.mxu0 0.0
    %673 = vmatpush1.msra.mxu0 0.0
    %674 = vmatprep.subr.mxu0 0.0
    %675 = vmatpush1.msra.mxu0 0.0
    %676 = vmatprep.subr.mxu0 0.0
    %677 = vmatpush1.msra.mxu0 0.0
    %678 = vmatprep.subr.mxu0 0.0
    %679 = vmatpush1.msra.mxu0 0.0
    %680 = vmatprep.subr.mxu0 0.0
    %681 = vmatpush1.msra.mxu0 0.0
    %682 = vmatprep.subr.mxu0 0.0
    %683 = vmatpush1.msra.mxu0 0.0
    %684 = vmatprep.subr.mxu0 0.0
    %685 = vmatpush1.msra.mxu0 0.0
    %686 = vmatprep.subr.mxu0 0.0
    %687 = vmatpush1.msra.mxu0 0.0
    %688 = vmatprep.mubr.f32.mxu0 0.0
    %689 = vmatmul.mubr.f32.gmra.mrb[0].mxu0 %v600
    %v690 = vpop.f32.mrb[0].mxu0
    %v691 = vadd.f32 %v622, %v690
    %v692 = vpop.f32.mrb[0].mxu0
    %693 = vdwg.mxu0
    %694 = vst [vmem:[#allocation17] sm:$0xff] %v460
    %695 = vst [vmem:[#allocation18] sm:$0xff] %v462
    %v696 = vxor.u32 %v691, 2147483648
    %v697 = vmul.f32 %v696, 1.442695
    %v698 = vpow.pop %v697
    %v699 = vadd.f32 %v698, 1.0
    %v700 = vrcp.pop %v699
    %v701 = vmul.f32 1.0, %v700
    %702 = vst [vmem:[#allocation20] sm:$0xff] %v701
    // Predicated region
    $region82: #{tpu_custom_call.1} parent=1 // pred_check
      _
    $region83: #{tpu_custom_call.1} parent=1 // pred_check_branch
      %704 = sbr.rel (0) target = $region85
    $region84: #{tpu_custom_call.1} parent=1 // pred_region
      %s706 = ssub.s32 128, 128
      %707 = vsyncadd [#allocation5], %s706
      %s709 = sshll.u32 [#allocation17], 4
      %s710 = int_to_ptr.vmem [resolvable:$true] %s709
      %712 = dma.vmem_to_hbm [thread:$0]  %s710, 128, %s12, [#allocation5]
    $region85: #{tpu_custom_call.1} parent=1 // pred_fallthru
      _
    // Predicated region
    $region86: #{tpu_custom_call.1} parent=1 // pred_check
      _
    $region87: #{tpu_custom_call.1} parent=1 // pred_check_branch
      %714 = sbr.rel (0) target = $region89
    $region88: #{tpu_custom_call.1} parent=1 // pred_region
      %s716 = ssub.s32 128, 128
      %717 = vsyncadd [#allocation19], %s716
      %s719 = sshll.u32 [#allocation18], 4
      %s720 = int_to_ptr.vmem [resolvable:$true] %s719
      %722 = dma.vmem_to_hbm [thread:$0]  %s720, 128, %s13, [#allocation19]
    $region89: #{tpu_custom_call.1} parent=1 // pred_fallthru
      _
    // Predicated region
    $region90: #{tpu_custom_call.1} parent=1 // pred_check
      _
    $region91: #{tpu_custom_call.1} parent=1 // pred_check_branch
      %724 = sbr.rel (0) target = $region93
    $region92: #{tpu_custom_call.1} parent=1 // pred_region
      %s726 = ssub.s32 128, 128
      %727 = vsyncadd [#allocation19], %s726
      %s729 = sshll.u32 [#allocation20], 4
      %s730 = int_to_ptr.vmem [resolvable:$true] %s729
      %732 = dma.vmem_to_hbm [thread:$0]  %s730, 128, %s14, [#allocation19]
    $region93: #{tpu_custom_call.1} parent=1 // pred_fallthru
      _
    // Predicated region
    $region94: #{tpu_custom_call.1} parent=1 // pred_check
      _
    $region95: #{tpu_custom_call.1} parent=1 // pred_check_branch
      %734 = sbr.rel (0) target = $region97
    $region96: #{tpu_custom_call.1} parent=1 // pred_region
      %735 = dma.done [#allocation5], 128
    $region97: #{tpu_custom_call.1} parent=1 // pred_fallthru
      _
    // Predicated region
    $region98: #{tpu_custom_call.1} parent=1 // pred_check
      _
    $region99: #{tpu_custom_call.1} parent=1 // pred_check_branch
      %737 = sbr.rel (0) target = $region101
    $region100: #{tpu_custom_call.1} parent=1 // pred_region
      %738 = dma.done [#allocation19], 128
    $region101: #{tpu_custom_call.1} parent=1 // pred_fallthru
      _
    // Predicated region
    $region102: #{tpu_custom_call.1} parent=1 // pred_check
      _
    $region103: #{tpu_custom_call.1} parent=1 // pred_check_branch
      %740 = sbr.rel (0) target = $region105
    $region104: #{tpu_custom_call.1} parent=1 // pred_region
      %741 = dma.done [#allocation19], 128
    $region105: #{tpu_custom_call.1} parent=1 // pred_fallthru
      _
    %742 = vsyncpa [#allocation4], 1
    %743 = vsyncpa [#allocation7], 1
    %744 = vsyncpa [#allocation10], 1
    %745 = vsyncpa [#allocation13], 1
    %746 = vsyncpa [#allocation16], 1
    %747 = vsyncpa [#allocation5], 1
    %748 = vsyncpa [#allocation19], 1

// kernel: tpu_custom_call.1
$region0: #{tpu_custom_call.1}
  #allocation0 [shape = 'u32[]', space=smem, size = 0x4, offset = 0x4, fixed_abs, tag = 'smem constant byte address 0x4 - core index']
  #allocation1 [shape = 'u32[144,128]{1,0:T(1,128)}', space=vmem, size = 0x12000, scoped, tag = 'internal scratch']
  #allocation2 [shape = 'f32[8,256]{1,0:T(8,128)}', space=vmem, size = 0x2000, scoped, tag = 'scratch operand']
  %s0 = inlined_call_operand.hbm [shape: f32[8,128], index: 0, kind: input, shape index: {}]
  %s1 = inlined_call_operand.hbm [shape: f32[8,128], index: 1, kind: input, shape index: {}]
  %s2 = inlined_call_operand.hbm [shape: f32[8,128], index: 2, kind: input, shape index: {}]
  %s3 = inlined_call_operand.hbm [shape: f32[128,128], index: 3, kind: input, shape index: {}]
  %s4 = inlined_call_operand.hbm [shape: f32[128,128], index: 4, kind: input, shape index: {}]
  %s5 = inlined_call_operand.vmem [shape: f32[1,128], index: 5, kind: input, shape index: {}]
  %s6 = inlined_call_operand.hbm [shape: f32[128,256], index: 6, kind: input, shape index: {}]
  %s7 = inlined_call_operand.vmem [shape: f32[1,256], index: 7, kind: input, shape index: {}]
  %s8 = inlined_call_operand.hbm [shape: f32[256,128], index: 8, kind: input, shape index: {}]
  %s9 = inlined_call_operand.vmem [shape: f32[1,128], index: 9, kind: input, shape index: {}]
  %s10 = inlined_call_operand.hbm [shape: f32[128,128], index: 10, kind: input, shape index: {}]
  %s11 = inlined_call_operand.vmem [shape: f32[1,128], index: 11, kind: input, shape index: {}]
  %s12 = inlined_call_operand.hbm [shape: f32[8,128], index: 12, kind: output, shape index: {0}]
  %s13 = inlined_call_operand.hbm [shape: f32[8,128], index: 13, kind: output, shape index: {1}]
  %s14 = inlined_call_operand.hbm [shape: f32[8,128], index: 14, kind: output, shape index: {2}]
  %15 = xla_tuple %s12, %s13, %s14
  %s16 = sld [smem:[#allocation0]]
  $region106: #{tpu_custom_call.1} parent=0
    _
  %s18 = ssub.s32 1, %s16
  %s19 = scalar_select 0, %s18, %s16
  $region1: #{tpu_custom_call.1} parent=0
    #allocation3 [shape = 'u8[4096]{0}', space=vmem, size = 0x1000, scoped, tag = 'input window, operand 0, single buffered']
    #allocation4 [shape = 's32[1]{0}', space=sflag, size = 0x4, scoped, tag = 'scoped memory for tpu_custom_call.1']
    #allocation5 [shape = 's32[1]{0}', space=sflag, size = 0x4, scoped, tag = 'scoped memory for tpu_custom_call.1']
    #allocation6 [shape = 'u8[4096]{0}', space=vmem, size = 0x1000, scoped, tag = 'input window, operand 1, single buffered']
    #allocation7 [shape = 's32[1]{0}', space=sflag, size = 0x4, scoped, tag = 'scoped memory for tpu_custom_call.1']
    #allocation8 [shape = 'u8[4096]{0}', space=vmem, size = 0x1000, scoped, tag = 'input window, operand 2, single buffered']
    #allocation9 [shape = 'u8[65536]{0}', space=vmem, size = 0x10000, scoped, tag = 'input window, operand 3, single buffered']
    #allocation10 [shape = 's32[1]{0}', space=sflag, size = 0x4, scoped, tag = 'scoped memory for tpu_custom_call.1']
    #allocation11 [shape = 'u8[65536]{0}', space=vmem, size = 0x10000, scoped, tag = 'input window, operand 4, single buffered']
    #allocation12 [shape = 'u8[131072]{0}', space=vmem, size = 0x20000, scoped, tag = 'input window, operand 6, single buffered']
    #allocation13 [shape = 's32[1]{0}', space=sflag, size = 0x4, scoped, tag = 'scoped memory for tpu_custom_call.1']
    #allocation14 [shape = 'u8[131072]{0}', space=vmem, size = 0x20000, scoped, tag = 'input window, operand 8, single buffered']
    #allocation15 [shape = 'u8[65536]{0}', space=vmem, size = 0x10000, scoped, tag = 'input window, operand 10, single buffered']
    #allocation16 [shape = 's32[1]{0}', space=sflag, size = 0x4, scoped, tag = 'scoped memory for tpu_custom_call.1']
    #allocation17 [shape = 'u8[4096]{0}', space=vmem, size = 0x1000, scoped, tag = 'output window, operand 0, single buffered']
    #allocation18 [shape = 'u8[4096]{0}', space=vmem, size = 0x1000, scoped, tag = 'output window, operand 1, single buffered']
    #allocation19 [shape = 's32[1]{0}', space=sflag, size = 0x4, scoped, tag = 'scoped memory for tpu_custom_call.1']
    #allocation20 [shape = 'u8[4096]{0}', space=vmem, size = 0x1000, scoped, tag = 'output window, operand 2, single buffered']
    %20 = vsyncpa [#allocation4], 0
    %21 = vsyncpa [#allocation7], 0
    %22 = vsyncpa [#allocation10], 0
    %23 = vsyncpa [#allocation13], 0
    %24 = vsyncpa [#allocation16], 0
    %25 = vsyncpa [#allocation5], 0
    %26 = vsyncpa [#allocation19], 0
    // Predicated region
    $region2: #{tpu_custom_call.1} parent=1 // pred_check
      _
    $region3: #{tpu_custom_call.1} parent=1 // pred_check_branch
      %28 = sbr.rel (0) target = $region5
    $region4: #{tpu_custom_call.1} parent=1 // pred_region
      %s30 = ssub.s32 128, 128
      %31 = vsyncadd [#allocation4], %s30
      %s33 = sshll.u32 [#allocation3], 4
      %s34 = int_to_ptr.vmem [resolvable:$true] %s33
      %36 = dma.hbm_to_vmem [thread:$0]  %s0, 128, %s34, [#allocation4]
    $region5: #{tpu_custom_call.1} parent=1 // pred_fallthru
      _
    // Predicated region
    $region6: #{tpu_custom_call.1} parent=1 // pred_check
      _
    $region7: #{tpu_custom_call.1} parent=1 // pred_check_branch
      %38 = sbr.rel (0) target = $region9
    $region8: #{tpu_custom_call.1} parent=1 // pred_region
      %s40 = ssub.s32 128, 128
      %41 = vsyncadd [#allocation7], %s40
      %s43 = sshll.u32 [#allocation6], 4
      %s44 = int_to_ptr.vmem [resolvable:$true] %s43
      %46 = dma.hbm_to_vmem [thread:$0]  %s1, 128, %s44, [#allocation7]
    $region9: #{tpu_custom_call.1} parent=1 // pred_fallthru
      _
    // Predicated region
    $region10: #{tpu_custom_call.1} parent=1 // pred_check
      _
    $region11: #{tpu_custom_call.1} parent=1 // pred_check_branch
      %48 = sbr.rel (0) target = $region13
    $region12: #{tpu_custom_call.1} parent=1 // pred_region
      %s50 = ssub.s32 128, 128
      %51 = vsyncadd [#allocation7], %s50
      %s53 = sshll.u32 [#allocation8], 4
      %s54 = int_to_ptr.vmem [resolvable:$true] %s53
      %56 = dma.hbm_to_vmem [thread:$0]  %s2, 128, %s54, [#allocation7]
    $region13: #{tpu_custom_call.1} parent=1 // pred_fallthru
      _
    // Predicated region
    $region14: #{tpu_custom_call.1} parent=1 // pred_check
      _
    $region15: #{tpu_custom_call.1} parent=1 // pred_check_branch
      %58 = sbr.rel (0) target = $region17
    $region16: #{tpu_custom_call.1} parent=1 // pred_region
      %s60 = ssub.s32 2048, 2048
      %61 = vsyncadd [#allocation10], %s60
      %s62 = sshll.u32 [#allocation9], 4
      %s63 = int_to_ptr.vmem [resolvable:$true] %s62
      %68 = dma.hbm_to_vmem [thread:$0]  %s3, 2048, %s63, [#allocation10], 128, 128, 8
    $region17: #{tpu_custom_call.1} parent=1 // pred_fallthru
      _
    // Predicated region
    $region18: #{tpu_custom_call.1} parent=1 // pred_check
      _
    $region19: #{tpu_custom_call.1} parent=1 // pred_check_branch
      %70 = sbr.rel (0) target = $region21
    $region20: #{tpu_custom_call.1} parent=1 // pred_region
      %s72 = ssub.s32 2048, 2048
      %73 = vsyncadd [#allocation10], %s72
      %s74 = sshll.u32 [#allocation11], 4
      %s75 = int_to_ptr.vmem [resolvable:$true] %s74
      %80 = dma.hbm_to_vmem [thread:$0]  %s4, 2048, %s75, [#allocation10], 128, 128, 8
    $region21: #{tpu_custom_call.1} parent=1 // pred_fallthru
      _
    // Predicated region
    $region22: #{tpu_custom_call.1} parent=1 // pred_check
      _
    $region23: #{tpu_custom_call.1} parent=1 // pred_check_branch
      %82 = sbr.rel (0) target = $region25
    $region24: #{tpu_custom_call.1} parent=1 // pred_region
      _
    $region25: #{tpu_custom_call.1} parent=1 // pred_fallthru
      _
    // Predicated region
    $region26: #{tpu_custom_call.1} parent=1 // pred_check
      _
    $region27: #{tpu_custom_call.1} parent=1 // pred_check_branch
      %84 = sbr.rel (0) target = $region29
    $region28: #{tpu_custom_call.1} parent=1 // pred_region
      %s86 = ssub.s32 4096, 4096
      %87 = vsyncadd [#allocation13], %s86
      %s88 = sshll.u32 [#allocation12], 4
      %s89 = int_to_ptr.vmem [resolvable:$true] %s88
      %94 = dma.hbm_to_vmem [thread:$0]  %s6, 4096, %s89, [#allocation13], 256, 256, 16
    $region29: #{tpu_custom_call.1} parent=1 // pred_fallthru
      _
    // Predicated region
    $region30: #{tpu_custom_call.1} parent=1 // pred_check
      _
    $region31: #{tpu_custom_call.1} parent=1 // pred_check_branch
      %96 = sbr.rel (0) target = $region33
    $region32: #{tpu_custom_call.1} parent=1 // pred_region
      _
    $region33: #{tpu_custom_call.1} parent=1 // pred_fallthru
      _
    // Predicated region
    $region34: #{tpu_custom_call.1} parent=1 // pred_check
      _
    $region35: #{tpu_custom_call.1} parent=1 // pred_check_branch
      %98 = sbr.rel (0) target = $region37
    $region36: #{tpu_custom_call.1} parent=1 // pred_region
      %s100 = ssub.s32 4096, 4096
      %101 = vsyncadd [#allocation13], %s100
      %s102 = sshll.u32 [#allocation14], 4
      %s103 = int_to_ptr.vmem [resolvable:$true] %s102
      %108 = dma.hbm_to_vmem [thread:$0]  %s8, 4096, %s103, [#allocation13], 128, 128, 8
    $region37: #{tpu_custom_call.1} parent=1 // pred_fallthru
      _
    // Predicated region
    $region38: #{tpu_custom_call.1} parent=1 // pred_check
      _
    $region39: #{tpu_custom_call.1} parent=1 // pred_check_branch
      %110 = sbr.rel (0) target = $region41
    $region40: #{tpu_custom_call.1} parent=1 // pred_region
      _
    $region41: #{tpu_custom_call.1} parent=1 // pred_fallthru
      _
    // Predicated region
    $region42: #{tpu_custom_call.1} parent=1 // pred_check
      _
    $region43: #{tpu_custom_call.1} parent=1 // pred_check_branch
      %112 = sbr.rel (0) target = $region45
    $region44: #{tpu_custom_call.1} parent=1 // pred_region
      %s114 = ssub.s32 2048, 2048
      %115 = vsyncadd [#allocation16], %s114
      %s116 = sshll.u32 [#allocation15], 4
      %s117 = int_to_ptr.vmem [resolvable:$true] %s116
      %122 = dma.hbm_to_vmem [thread:$0]  %s10, 2048, %s117, [#allocation16], 128, 128, 8
    $region45: #{tpu_custom_call.1} parent=1 // pred_fallthru
      _
    // Predicated region
    $region46: #{tpu_custom_call.1} parent=1 // pred_check
      _
    $region47: #{tpu_custom_call.1} parent=1 // pred_check_branch
      %124 = sbr.rel (0) target = $region49
    $region48: #{tpu_custom_call.1} parent=1 // pred_region
      _
    $region49: #{tpu_custom_call.1} parent=1 // pred_fallthru
      _
    // Predicated region
    $region50: #{tpu_custom_call.1} parent=1 // pred_check
      _
    $region51: #{tpu_custom_call.1} parent=1 // pred_check_branch
      %126 = sbr.rel (0) target = $region53
    $region52: #{tpu_custom_call.1} parent=1 // pred_region
      %127 = dma.done [#allocation4], 128
    $region53: #{tpu_custom_call.1} parent=1 // pred_fallthru
      _
    // Predicated region
    $region54: #{tpu_custom_call.1} parent=1 // pred_check
      _
    $region55: #{tpu_custom_call.1} parent=1 // pred_check_branch
      %129 = sbr.rel (0) target = $region57
    $region56: #{tpu_custom_call.1} parent=1 // pred_region
      %130 = dma.done [#allocation7], 128
    $region57: #{tpu_custom_call.1} parent=1 // pred_fallthru
      _
    // Predicated region
    $region58: #{tpu_custom_call.1} parent=1 // pred_check
      _
    $region59: #{tpu_custom_call.1} parent=1 // pred_check_branch
      %132 = sbr.rel (0) target = $region61
    $region60: #{tpu_custom_call.1} parent=1 // pred_region
      %133 = dma.done [#allocation7], 128
    $region61: #{tpu_custom_call.1} parent=1 // pred_fallthru
      _
    // Predicated region
    $region62: #{tpu_custom_call.1} parent=1 // pred_check
      _
    $region63: #{tpu_custom_call.1} parent=1 // pred_check_branch
      %135 = sbr.rel (0) target = $region65
    $region64: #{tpu_custom_call.1} parent=1 // pred_region
      %136 = dma.done [#allocation10], 2048
    $region65: #{tpu_custom_call.1} parent=1 // pred_fallthru
      _
    // Predicated region
    $region66: #{tpu_custom_call.1} parent=1 // pred_check
      _
    $region67: #{tpu_custom_call.1} parent=1 // pred_check_branch
      %138 = sbr.rel (0) target = $region69
    $region68: #{tpu_custom_call.1} parent=1 // pred_region
      %139 = dma.done [#allocation10], 2048
    $region69: #{tpu_custom_call.1} parent=1 // pred_fallthru
      _
    // Predicated region
    $region70: #{tpu_custom_call.1} parent=1 // pred_check
      _
    $region71: #{tpu_custom_call.1} parent=1 // pred_check_branch
      %141 = sbr.rel (0) target = $region73
    $region72: #{tpu_custom_call.1} parent=1 // pred_region
      %142 = dma.done [#allocation13], 4096
    $region73: #{tpu_custom_call.1} parent=1 // pred_fallthru
      _
    // Predicated region
    $region74: #{tpu_custom_call.1} parent=1 // pred_check
      _
    $region75: #{tpu_custom_call.1} parent=1 // pred_check_branch
      %144 = sbr.rel (0) target = $region77
    $region76: #{tpu_custom_call.1} parent=1 // pred_region
      %145 = dma.done [#allocation13], 4096
    $region77: #{tpu_custom_call.1} parent=1 // pred_fallthru
      _
    // Predicated region
    $region78: #{tpu_custom_call.1} parent=1 // pred_check
      _
    $region79: #{tpu_custom_call.1} parent=1 // pred_check_branch
      %147 = sbr.rel (0) target = $region81
    $region80: #{tpu_custom_call.1} parent=1 // pred_region
      %148 = dma.done [#allocation16], 2048
    $region81: #{tpu_custom_call.1} parent=1 // pred_fallthru
      _
    %v149 = vld [vmem:[#allocation3] sm:$0xff]
    %v150 = vld [vmem:[#allocation6] sm:$0xff]
    %v151 = vld [vmem:[#allocation9] sm:$0xff]
    %v152 = vld [vmem:[#allocation9 + $0x8] sm:$0xff]
    %v153 = vld [vmem:[#allocation9 + $0x10] sm:$0xff]
    %v154 = vld [vmem:[#allocation9 + $0x18] sm:$0xff]
    %v155 = vld [vmem:[#allocation9 + $0x20] sm:$0xff]
    %v156 = vld [vmem:[#allocation9 + $0x28] sm:$0xff]
    %v157 = vld [vmem:[#allocation9 + $0x30] sm:$0xff]
    %v158 = vld [vmem:[#allocation9 + $0x38] sm:$0xff]
    %v159 = vld [vmem:[#allocation9 + $0x40] sm:$0xff]
    %v160 = vld [vmem:[#allocation9 + $0x48] sm:$0xff]
    %v161 = vld [vmem:[#allocation9 + $0x50] sm:$0xff]
    %v162 = vld [vmem:[#allocation9 + $0x58] sm:$0xff]
    %v163 = vld [vmem:[#allocation9 + $0x60] sm:$0xff]
    %v164 = vld [vmem:[#allocation9 + $0x68] sm:$0xff]
    %v165 = vld [vmem:[#allocation9 + $0x70] sm:$0xff]
    %v166 = vld [vmem:[#allocation9 + $0x78] sm:$0xff]
    %v167 = vld [vmem:[#allocation11] sm:$0xff]
    %v168 = vld [vmem:[#allocation11 + $0x8] sm:$0xff]
    %v169 = vld [vmem:[#allocation11 + $0x10] sm:$0xff]
    %v170 = vld [vmem:[#allocation11 + $0x18] sm:$0xff]
    %v171 = vld [vmem:[#allocation11 + $0x20] sm:$0xff]
    %v172 = vld [vmem:[#allocation11 + $0x28] sm:$0xff]
    %v173 = vld [vmem:[#allocation11 + $0x30] sm:$0xff]
    %v174 = vld [vmem:[#allocation11 + $0x38] sm:$0xff]
    %v175 = vld [vmem:[#allocation11 + $0x40] sm:$0xff]
    %v176 = vld [vmem:[#allocation11 + $0x48] sm:$0xff]
    %v177 = vld [vmem:[#allocation11 + $0x50] sm:$0xff]
    %v178 = vld [vmem:[#allocation11 + $0x58] sm:$0xff]
    %v179 = vld [vmem:[#allocation11 + $0x60] sm:$0xff]
    %v180 = vld [vmem:[#allocation11 + $0x68] sm:$0xff]
    %v181 = vld [vmem:[#allocation11 + $0x70] sm:$0xff]
    %v182 = vld [vmem:[#allocation11 + $0x78] sm:$0xff]
    %183 = vmatprep.subr.mxu0 0.0
    %184 = vmatpush1.msra.mxu0 %v167
    %185 = vmatprep.subr.mxu0 0.0
    %186 = vmatpush1.msra.mxu0 %v168
    %187 = vmatprep.subr.mxu0 0.0
    %188 = vmatpush1.msra.mxu0 %v169
    %189 = vmatprep.subr.mxu0 0.0
    %190 = vmatpush1.msra.mxu0 %v170
    %191 = vmatprep.subr.mxu0 0.0
    %192 = vmatpush1.msra.mxu0 %v171
    %193 = vmatprep.subr.mxu0 0.0
    %194 = vmatpush1.msra.mxu0 %v172
    %195 = vmatprep.subr.mxu0 0.0
    %196 = vmatpush1.msra.mxu0 %v173
    %197 = vmatprep.subr.mxu0 0.0
    %198 = vmatpush1.msra.mxu0 %v174
    %199 = vmatprep.subr.mxu0 0.0
    %200 = vmatpush1.msra.mxu0 %v175
    %201 = vmatprep.subr.mxu0 0.0
    %202 = vmatpush1.msra.mxu0 %v176
    %203 = vmatprep.subr.mxu0 0.0
    %204 = vmatpush1.msra.mxu0 %v177
    %205 = vmatprep.subr.mxu0 0.0
    %206 = vmatpush1.msra.mxu0 %v178
    %207 = vmatprep.subr.mxu0 0.0
    %208 = vmatpush1.msra.mxu0 %v179
    %209 = vmatprep.subr.mxu0 0.0
    %210 = vmatpush1.msra.mxu0 %v180
    %211 = vmatprep.subr.mxu0 0.0
    %212 = vmatpush1.msra.mxu0 %v181
    %213 = vmatprep.subr.mxu0 0.0
    %214 = vmatpush1.msra.mxu0 %v182
    %215 = vmatprep.subr.mxu0 0.0
    %216 = vmatpush1.msra.mxu0 0.0
    %217 = vmatprep.subr.mxu0 0.0
    %218 = vmatpush1.msra.mxu0 0.0
    %219 = vmatprep.subr.mxu0 0.0
    %220 = vmatpush1.msra.mxu0 0.0
    %221 = vmatprep.subr.mxu0 0.0
    %222 = vmatpush1.msra.mxu0 0.0
    %223 = vmatprep.subr.mxu0 0.0
    %224 = vmatpush1.msra.mxu0 0.0
    %225 = vmatprep.subr.mxu0 0.0
    %226 = vmatpush1.msra.mxu0 0.0
    %227 = vmatprep.subr.mxu0 0.0
    %228 = vmatpush1.msra.mxu0 0.0
    %229 = vmatprep.subr.mxu0 0.0
    %230 = vmatpush1.msra.mxu0 0.0
    %231 = vmatprep.subr.mxu0 0.0
    %232 = vmatpush1.msra.mxu0 0.0
    %233 = vmatprep.subr.mxu0 0.0
    %234 = vmatpush1.msra.mxu0 0.0
    %235 = vmatprep.subr.mxu0 0.0
    %236 = vmatpush1.msra.mxu0 0.0
    %237 = vmatprep.subr.mxu0 0.0
    %238 = vmatpush1.msra.mxu0 0.0
    %239 = vmatprep.subr.mxu0 0.0
    %240 = vmatpush1.msra.mxu0 0.0
    %241 = vmatprep.subr.mxu0 0.0
    %242 = vmatpush1.msra.mxu0 0.0
    %243 = vmatprep.subr.mxu0 0.0
    %244 = vmatpush1.msra.mxu0 0.0
    %245 = vmatprep.subr.mxu0 0.0
    %246 = vmatpush1.msra.mxu0 0.0
    %247 = vmatprep.mubr.f32.mxu0 0.0
    %248 = vmatmul.mubr.f32.gmra.mrb[0].mxu0 %v150
    %v249 = vpop.f32.mrb[0].mxu0
    %v250 = vadd.f32 0.0, %v249
    %v251 = vpop.f32.mrb[0].mxu0
    %252 = vdwg.mxu0
    %253 = vmatprep.subr.mxu0 0.0
    %254 = vmatpush1.msra.mxu0 %v151
    %255 = vmatprep.subr.mxu0 0.0
    %256 = vmatpush1.msra.mxu0 %v152
    %257 = vmatprep.subr.mxu0 0.0
    %258 = vmatpush1.msra.mxu0 %v153
    %259 = vmatprep.subr.mxu0 0.0
    %260 = vmatpush1.msra.mxu0 %v154
    %261 = vmatprep.subr.mxu0 0.0
    %262 = vmatpush1.msra.mxu0 %v155
    %263 = vmatprep.subr.mxu0 0.0
    %264 = vmatpush1.msra.mxu0 %v156
    %265 = vmatprep.subr.mxu0 0.0
    %266 = vmatpush1.msra.mxu0 %v157
    %267 = vmatprep.subr.mxu0 0.0
    %268 = vmatpush1.msra.mxu0 %v158
    %269 = vmatprep.subr.mxu0 0.0
    %270 = vmatpush1.msra.mxu0 %v159
    %271 = vmatprep.subr.mxu0 0.0
    %272 = vmatpush1.msra.mxu0 %v160
    %273 = vmatprep.subr.mxu0 0.0
    %274 = vmatpush1.msra.mxu0 %v161
    %275 = vmatprep.subr.mxu0 0.0
    %276 = vmatpush1.msra.mxu0 %v162
    %277 = vmatprep.subr.mxu0 0.0
    %278 = vmatpush1.msra.mxu0 %v163
    %279 = vmatprep.subr.mxu0 0.0
    %280 = vmatpush1.msra.mxu0 %v164
    %281 = vmatprep.subr.mxu0 0.0
    %282 = vmatpush1.msra.mxu0 %v165
    %283 = vmatprep.subr.mxu0 0.0
    %284 = vmatpush1.msra.mxu0 %v166
    %285 = vmatprep.subr.mxu0 0.0
    %286 = vmatpush1.msra.mxu0 0.0
    %287 = vmatprep.subr.mxu0 0.0
    %288 = vmatpush1.msra.mxu0 0.0
    %289 = vmatprep.subr.mxu0 0.0
    %290 = vmatpush1.msra.mxu0 0.0
    %291 = vmatprep.subr.mxu0 0.0
    %292 = vmatpush1.msra.mxu0 0.0
    %293 = vmatprep.subr.mxu0 0.0
    %294 = vmatpush1.msra.mxu0 0.0
    %295 = vmatprep.subr.mxu0 0.0
    %296 = vmatpush1.msra.mxu0 0.0
    %297 = vmatprep.subr.mxu0 0.0
    %298 = vmatpush1.msra.mxu0 0.0
    %299 = vmatprep.subr.mxu0 0.0
    %300 = vmatpush1.msra.mxu0 0.0
    %301 = vmatprep.subr.mxu0 0.0
    %302 = vmatpush1.msra.mxu0 0.0
    %303 = vmatprep.subr.mxu0 0.0
    %304 = vmatpush1.msra.mxu0 0.0
    %305 = vmatprep.subr.mxu0 0.0
    %306 = vmatpush1.msra.mxu0 0.0
    %307 = vmatprep.subr.mxu0 0.0
    %308 = vmatpush1.msra.mxu0 0.0
    %309 = vmatprep.subr.mxu0 0.0
    %310 = vmatpush1.msra.mxu0 0.0
    %311 = vmatprep.subr.mxu0 0.0
    %312 = vmatpush1.msra.mxu0 0.0
    %313 = vmatprep.subr.mxu0 0.0
    %314 = vmatpush1.msra.mxu0 0.0
    %315 = vmatprep.subr.mxu0 0.0
    %316 = vmatpush1.msra.mxu0 0.0
    %317 = vmatprep.mubr.f32.mxu0 0.0
    %318 = vmatmul.mubr.f32.gmra.mrb[0].mxu0 %v149
    %v319 = vpop.f32.mrb[0].mxu0
    %v320 = vadd.f32 %v250, %v319
    %v321 = vpop.f32.mrb[0].mxu0
    %322 = vdwg.mxu0
    %v323 = vld [vmem:[%s5] sm:$0x1]
    %v325 = vlaneseq
    %v326 = vshrl.u32 %v325, 7
    %v327 = vsub.s32 0, %v326
    %v328 = vrot.slane %v323, %v327
    %v330 = vadd.f32 %v320, %v328
    %v331 = vmax.f32 %v330, 0.0
    %vm332 = vcmp.ne.f32.partialorder %v330, %v330
    %v333 = vadd.f32 %v330, 0.0
    %v334 = vand.u32 2147483647, %v330
    %v335 = vsub.f32 0.0, %v334
    %v336 = vmul.f32 %v335, 1.442695
    %v337 = vpow.pop %v336
    %v338 = vadd.f32 %v337, 1.0
    %v339 = vlog2.pop %v338
    %v340 = vmul.f32 %v339, 0.6931472
    %v341 = vmul.f32 -0.5, %v337
    %v342 = vadd.f32 %v341, 1.0
    %v343 = vmul.f32 %v342, %v337
    %v344 = vand.u32 2147483647, %v337
    %vm345 = vcmp.lt.f32.partialorder %v344, 0.0004427343
    %v346 = vsel %vm345, %v343, %v340
    %v347 = vadd.f32 %v331, %v346
    %v348 = vsel %vm332, %v333, %v347
    %v349 = vld [vmem:[#allocation12] sm:$0xff]
    %v350 = vld [vmem:[#allocation12 + $0x8] sm:$0xff]
    %v351 = vld [vmem:[#allocation12 + $0x10] sm:$0xff]
    %v352 = vld [vmem:[#allocation12 + $0x18] sm:$0xff]
    %v353 = vld [vmem:[#allocation12 + $0x20] sm:$0xff]
    %v354 = vld [vmem:[#allocation12 + $0x28] sm:$0xff]
    %v355 = vld [vmem:[#allocation12 + $0x30] sm:$0xff]
    %v356 = vld [vmem:[#allocation12 + $0x38] sm:$0xff]
    %v357 = vld [vmem:[#allocation12 + $0x40] sm:$0xff]
    %v358 = vld [vmem:[#allocation12 + $0x48] sm:$0xff]
    %v359 = vld [vmem:[#allocation12 + $0x50] sm:$0xff]
    %v360 = vld [vmem:[#allocation12 + $0x58] sm:$0xff]
    %v361 = vld [vmem:[#allocation12 + $0x60] sm:$0xff]
    %v362 = vld [vmem:[#allocation12 + $0x68] sm:$0xff]
    %v363 = vld [vmem:[#allocation12 + $0x70] sm:$0xff]
    %v364 = vld [vmem:[#allocation12 + $0x78] sm:$0xff]
    %v365 = vld [vmem:[#allocation12 + $0x80] sm:$0xff]
    %v366 = vld [vmem:[#allocation12 + $0x88] sm:$0xff]
    %v367 = vld [vmem:[#allocation12 + $0x90] sm:$0xff]
    %v368 = vld [vmem:[#allocation12 + $0x98] sm:$0xff]
    %v369 = vld [vmem:[#allocation12 + $0xa0] sm:$0xff]
    %v370 = vld [vmem:[#allocation12 + $0xa8] sm:$0xff]
    %v371 = vld [vmem:[#allocation12 + $0xb0] sm:$0xff]
    %v372 = vld [vmem:[#allocation12 + $0xb8] sm:$0xff]
    %v373 = vld [vmem:[#allocation12 + $0xc0] sm:$0xff]
    %v374 = vld [vmem:[#allocation12 + $0xc8] sm:$0xff]
    %v375 = vld [vmem:[#allocation12 + $0xd0] sm:$0xff]
    %v376 = vld [vmem:[#allocation12 + $0xd8] sm:$0xff]
    %v377 = vld [vmem:[#allocation12 + $0xe0] sm:$0xff]
    %v378 = vld [vmem:[#allocation12 + $0xe8] sm:$0xff]
    %v379 = vld [vmem:[#allocation12 + $0xf0] sm:$0xff]
    %v380 = vld [vmem:[#allocation12 + $0xf8] sm:$0xff]
    %v381 = vld [vmem:[%s7] sm:$0x3]
    %v383 = vlaneseq
    %v384 = vshrl.u32 %v383, 7
    %v385 = vsub.s32 0, %v384
    %v386 = vrot.slane %v381, %v385
    %v387 = vlaneseq
    %v388 = vshrl.u32 %v387, 7
    %v389 = vsub.s32 1, %v388
    %v390 = vrot.slane %v381, %v389
    %393 = vmatprep.subr.mxu0 %v350
    %394 = vmatpush1.msra.mxu0 %v349
    %395 = vmatprep.subr.mxu0 %v352
    %396 = vmatpush1.msra.mxu0 %v351
    %397 = vmatprep.subr.mxu0 %v354
    %398 = vmatpush1.msra.mxu0 %v353
    %399 = vmatprep.subr.mxu0 %v356
    %400 = vmatpush1.msra.mxu0 %v355
    %401 = vmatprep.subr.mxu0 %v358
    %402 = vmatpush1.msra.mxu0 %v357
    %403 = vmatprep.subr.mxu0 %v360
    %404 = vmatpush1.msra.mxu0 %v359
    %405 = vmatprep.subr.mxu0 %v362
    %406 = vmatpush1.msra.mxu0 %v361
    %407 = vmatprep.subr.mxu0 %v364
    %408 = vmatpush1.msra.mxu0 %v363
    %409 = vmatprep.subr.mxu0 %v366
    %410 = vmatpush1.msra.mxu0 %v365
    %411 = vmatprep.subr.mxu0 %v368
    %412 = vmatpush1.msra.mxu0 %v367
    %413 = vmatprep.subr.mxu0 %v370
    %414 = vmatpush1.msra.mxu0 %v369
    %415 = vmatprep.subr.mxu0 %v372
    %416 = vmatpush1.msra.mxu0 %v371
    %417 = vmatprep.subr.mxu0 %v374
    %418 = vmatpush1.msra.mxu0 %v373
    %419 = vmatprep.subr.mxu0 %v376
    %420 = vmatpush1.msra.mxu0 %v375
    %421 = vmatprep.subr.mxu0 %v378
    %422 = vmatpush1.msra.mxu0 %v377
    %423 = vmatprep.subr.mxu0 %v380
    %424 = vmatpush1.msra.mxu0 %v379
    %425 = vmatprep.subr.mxu0 0.0
    %426 = vmatpush1.msra.mxu0 0.0
    %427 = vmatprep.subr.mxu0 0.0
    %428 = vmatpush1.msra.mxu0 0.0
    %429 = vmatprep.subr.mxu0 0.0
    %430 = vmatpush1.msra.mxu0 0.0
    %431 = vmatprep.subr.mxu0 0.0
    %432 = vmatpush1.msra.mxu0 0.0
    %433 = vmatprep.subr.mxu0 0.0
    %434 = vmatpush1.msra.mxu0 0.0
    %435 = vmatprep.subr.mxu0 0.0
    %436 = vmatpush1.msra.mxu0 0.0
    %437 = vmatprep.subr.mxu0 0.0
    %438 = vmatpush1.msra.mxu0 0.0
    %439 = vmatprep.subr.mxu0 0.0
    %440 = vmatpush1.msra.mxu0 0.0
    %441 = vmatprep.subr.mxu0 0.0
    %442 = vmatpush1.msra.mxu0 0.0
    %443 = vmatprep.subr.mxu0 0.0
    %444 = vmatpush1.msra.mxu0 0.0
    %445 = vmatprep.subr.mxu0 0.0
    %446 = vmatpush1.msra.mxu0 0.0
    %447 = vmatprep.subr.mxu0 0.0
    %448 = vmatpush1.msra.mxu0 0.0
    %449 = vmatprep.subr.mxu0 0.0
    %450 = vmatpush1.msra.mxu0 0.0
    %451 = vmatprep.subr.mxu0 0.0
    %452 = vmatpush1.msra.mxu0 0.0
    %453 = vmatprep.subr.mxu0 0.0
    %454 = vmatpush1.msra.mxu0 0.0
    %455 = vmatprep.subr.mxu0 0.0
    %456 = vmatpush1.msra.mxu0 0.0
    %457 = vmatprep.mubr.f32.mxu0 0.0
    %458 = vmatmul.mubr.f32.gmra.mrb[0].mxu0 %v348
    %v459 = vpop.f32.mrb[0].mxu0
    %v460 = vadd.f32 %v386, %v459
    %v461 = vpop.f32.mrb[0].mxu0
    %v462 = vadd.f32 %v390, %v461
    %463 = vdwg.mxu0
    %v464 = vld [vmem:[#allocation8] sm:$0xff]
    %v465 = vmul.f32 %v462, 0.5
    %v466 = vmul.f32 %v465, 1.442695
    %v467 = vpow.pop %v466
    %v468 = vmul.f32 %v464, %v467
    %v469 = vadd.f32 %v460, %v468
    %470 = vst [vmem:[#allocation2] sm:$0xff] %v469
    %471 = vst [vmem:[#allocation2 + $0x8] sm:$0xff] %v150
    %v472 = vld [vmem:[#allocation2] sm:$0xff]
    %v473 = vld [vmem:[#allocation2 + $0x8] sm:$0xff]
    %v474 = vld [vmem:[#allocation14] sm:$0xff]
    %v475 = vld [vmem:[#allocation14 + $0x8] sm:$0xff]
    %v476 = vld [vmem:[#allocation14 + $0x10] sm:$0xff]
    %v477 = vld [vmem:[#allocation14 + $0x18] sm:$0xff]
    %v478 = vld [vmem:[#allocation14 + $0x20] sm:$0xff]
    %v479 = vld [vmem:[#allocation14 + $0x28] sm:$0xff]
    %v480 = vld [vmem:[#allocation14 + $0x30] sm:$0xff]
    %v481 = vld [vmem:[#allocation14 + $0x38] sm:$0xff]
    %v482 = vld [vmem:[#allocation14 + $0x40] sm:$0xff]
    %v483 = vld [vmem:[#allocation14 + $0x48] sm:$0xff]
    %v484 = vld [vmem:[#allocation14 + $0x50] sm:$0xff]
    %v485 = vld [vmem:[#allocation14 + $0x58] sm:$0xff]
    %v486 = vld [vmem:[#allocation14 + $0x60] sm:$0xff]
    %v487 = vld [vmem:[#allocation14 + $0x68] sm:$0xff]
    %v488 = vld [vmem:[#allocation14 + $0x70] sm:$0xff]
    %v489 = vld [vmem:[#allocation14 + $0x78] sm:$0xff]
    %v490 = vld [vmem:[#allocation14 + $0x80] sm:$0xff]
    %v491 = vld [vmem:[#allocation14 + $0x88] sm:$0xff]
    %v492 = vld [vmem:[#allocation14 + $0x90] sm:$0xff]
    %v493 = vld [vmem:[#allocation14 + $0x98] sm:$0xff]
    %v494 = vld [vmem:[#allocation14 + $0xa0] sm:$0xff]
    %v495 = vld [vmem:[#allocation14 + $0xa8] sm:$0xff]
    %v496 = vld [vmem:[#allocation14 + $0xb0] sm:$0xff]
    %v497 = vld [vmem:[#allocation14 + $0xb8] sm:$0xff]
    %v498 = vld [vmem:[#allocation14 + $0xc0] sm:$0xff]
    %v499 = vld [vmem:[#allocation14 + $0xc8] sm:$0xff]
    %v500 = vld [vmem:[#allocation14 + $0xd0] sm:$0xff]
    %v501 = vld [vmem:[#allocation14 + $0xd8] sm:$0xff]
    %v502 = vld [vmem:[#allocation14 + $0xe0] sm:$0xff]
    %v503 = vld [vmem:[#allocation14 + $0xe8] sm:$0xff]
    %v504 = vld [vmem:[#allocation14 + $0xf0] sm:$0xff]
    %v505 = vld [vmem:[#allocation14 + $0xf8] sm:$0xff]
    %v506 = vld [vmem:[%s9] sm:$0x1]
    %v508 = vlaneseq
    %v509 = vshrl.u32 %v508, 7
    %v510 = vsub.s32 0, %v509
    %v511 = vrot.slane %v506, %v510
    %513 = vmatprep.subr.mxu0 0.0
    %514 = vmatpush1.msra.mxu0 %v474
    %515 = vmatprep.subr.mxu0 0.0
    %516 = vmatpush1.msra.mxu0 %v475
    %517 = vmatprep.subr.mxu0 0.0
    %518 = vmatpush1.msra.mxu0 %v476
    %519 = vmatprep.subr.mxu0 0.0
    %520 = vmatpush1.msra.mxu0 %v477
    %521 = vmatprep.subr.mxu0 0.0
    %522 = vmatpush1.msra.mxu0 %v478
    %523 = vmatprep.subr.mxu0 0.0
    %524 = vmatpush1.msra.mxu0 %v479
    %525 = vmatprep.subr.mxu0 0.0
    %526 = vmatpush1.msra.mxu0 %v480
    %527 = vmatprep.subr.mxu0 0.0
    %528 = vmatpush1.msra.mxu0 %v481
    %529 = vmatprep.subr.mxu0 0.0
    %530 = vmatpush1.msra.mxu0 %v482
    %531 = vmatprep.subr.mxu0 0.0
    %532 = vmatpush1.msra.mxu0 %v483
    %533 = vmatprep.subr.mxu0 0.0
    %534 = vmatpush1.msra.mxu0 %v484
    %535 = vmatprep.subr.mxu0 0.0
    %536 = vmatpush1.msra.mxu0 %v485
    %537 = vmatprep.subr.mxu0 0.0
    %538 = vmatpush1.msra.mxu0 %v486
    %539 = vmatprep.subr.mxu0 0.0
    %540 = vmatpush1.msra.mxu0 %v487
    %541 = vmatprep.subr.mxu0 0.0
    %542 = vmatpush1.msra.mxu0 %v488
    %543 = vmatprep.subr.mxu0 0.0
    %544 = vmatpush1.msra.mxu0 %v489
    %545 = vmatprep.subr.mxu0 0.0
    %546 = vmatpush1.msra.mxu0 %v490
    %547 = vmatprep.subr.mxu0 0.0
    %548 = vmatpush1.msra.mxu0 %v491
    %549 = vmatprep.subr.mxu0 0.0
    %550 = vmatpush1.msra.mxu0 %v492
    %551 = vmatprep.subr.mxu0 0.0
    %552 = vmatpush1.msra.mxu0 %v493
    %553 = vmatprep.subr.mxu0 0.0
    %554 = vmatpush1.msra.mxu0 %v494
    %555 = vmatprep.subr.mxu0 0.0
    %556 = vmatpush1.msra.mxu0 %v495
    %557 = vmatprep.subr.mxu0 0.0
    %558 = vmatpush1.msra.mxu0 %v496
    %559 = vmatprep.subr.mxu0 0.0
    %560 = vmatpush1.msra.mxu0 %v497
    %561 = vmatprep.subr.mxu0 0.0
    %562 = vmatpush1.msra.mxu0 %v498
    %563 = vmatprep.subr.mxu0 0.0
    %564 = vmatpush1.msra.mxu0 %v499
    %565 = vmatprep.subr.mxu0 0.0
    %566 = vmatpush1.msra.mxu0 %v500
    %567 = vmatprep.subr.mxu0 0.0
    %568 = vmatpush1.msra.mxu0 %v501
    %569 = vmatprep.subr.mxu0 0.0
    %570 = vmatpush1.msra.mxu0 %v502
    %571 = vmatprep.subr.mxu0 0.0
    %572 = vmatpush1.msra.mxu0 %v503
    %573 = vmatprep.subr.mxu0 0.0
    %574 = vmatpush1.msra.mxu0 %v504
    %575 = vmatprep.subr.mxu0 0.0
    %576 = vmatpush1.msra.mxu0 %v505
    %577 = vmatprep.mubr.f32.mxu0 %v473
    %578 = vmatmul.mubr.f32.gmra.mrb[0].mxu0 %v472
    %v579 = vpop.f32.mrb[0].mxu0
    %v580 = vadd.f32 %v511, %v579
    %v581 = vpop.f32.mrb[0].mxu0
    %582 = vdwg.mxu0
    %v583 = vmax.f32 %v580, 0.0
    %vm584 = vcmp.ne.f32.partialorder %v580, %v580
    %v585 = vadd.f32 %v580, 0.0
    %v586 = vand.u32 2147483647, %v580
    %v587 = vsub.f32 0.0, %v586
    %v588 = vmul.f32 %v587, 1.442695
    %v589 = vpow.pop %v588
    %v590 = vadd.f32 %v589, 1.0
    %v591 = vlog2.pop %v590
    %v592 = vmul.f32 %v591, 0.6931472
    %v593 = vmul.f32 -0.5, %v589
    %v594 = vadd.f32 %v593, 1.0
    %v595 = vmul.f32 %v594, %v589
    %v596 = vand.u32 2147483647, %v589
    %vm597 = vcmp.lt.f32.partialorder %v596, 0.0004427343
    %v598 = vsel %vm597, %v595, %v592
    %v599 = vadd.f32 %v583, %v598
    %v600 = vsel %vm584, %v585, %v599
    %v601 = vld [vmem:[#allocation15] sm:$0xff]
    %v602 = vld [vmem:[#allocation15 + $0x8] sm:$0xff]
    %v603 = vld [vmem:[#allocation15 + $0x10] sm:$0xff]
    %v604 = vld [vmem:[#allocation15 + $0x18] sm:$0xff]
    %v605 = vld [vmem:[#allocation15 + $0x20] sm:$0xff]
    %v606 = vld [vmem:[#allocation15 + $0x28] sm:$0xff]
    %v607 = vld [vmem:[#allocation15 + $0x30] sm:$0xff]
    %v608 = vld [vmem:[#allocation15 + $0x38] sm:$0xff]
    %v609 = vld [vmem:[#allocation15 + $0x40] sm:$0xff]
    %v610 = vld [vmem:[#allocation15 + $0x48] sm:$0xff]
    %v611 = vld [vmem:[#allocation15 + $0x50] sm:$0xff]
    %v612 = vld [vmem:[#allocation15 + $0x58] sm:$0xff]
    %v613 = vld [vmem:[#allocation15 + $0x60] sm:$0xff]
    %v614 = vld [vmem:[#allocation15 + $0x68] sm:$0xff]
    %v615 = vld [vmem:[#allocation15 + $0x70] sm:$0xff]
    %v616 = vld [vmem:[#allocation15 + $0x78] sm:$0xff]
    %v617 = vld [vmem:[%s11] sm:$0x1]
    %v619 = vlaneseq
    %v620 = vshrl.u32 %v619, 7
    %v621 = vsub.s32 0, %v620
    %v622 = vrot.slane %v617, %v621
    %624 = vmatprep.subr.mxu0 0.0
    %625 = vmatpush1.msra.mxu0 %v601
    %626 = vmatprep.subr.mxu0 0.0
    %627 = vmatpush1.msra.mxu0 %v602
    %628 = vmatprep.subr.mxu0 0.0
    %629 = vmatpush1.msra.mxu0 %v603
    %630 = vmatprep.subr.mxu0 0.0
    %631 = vmatpush1.msra.mxu0 %v604
    %632 = vmatprep.subr.mxu0 0.0
    %633 = vmatpush1.msra.mxu0 %v605
    %634 = vmatprep.subr.mxu0 0.0
    %635 = vmatpush1.msra.mxu0 %v606
    %636 = vmatprep.subr.mxu0 0.0
    %637 = vmatpush1.msra.mxu0 %v607
    %638 = vmatprep.subr.mxu0 0.0
    %639 = vmatpush1.msra.mxu0 %v608
    %640 = vmatprep.subr.mxu0 0.0
    %641 = vmatpush1.msra.mxu0 %v609
    %642 = vmatprep.subr.mxu0 0.0
    %643 = vmatpush1.msra.mxu0 %v610
    %644 = vmatprep.subr.mxu0 0.0
    %645 = vmatpush1.msra.mxu0 %v611
    %646 = vmatprep.subr.mxu0 0.0
    %647 = vmatpush1.msra.mxu0 %v612
    %648 = vmatprep.subr.mxu0 0.0
    %649 = vmatpush1.msra.mxu0 %v613
    %650 = vmatprep.subr.mxu0 0.0
    %651 = vmatpush1.msra.mxu0 %v614
    %652 = vmatprep.subr.mxu0 0.0
    %653 = vmatpush1.msra.mxu0 %v615
    %654 = vmatprep.subr.mxu0 0.0
    %655 = vmatpush1.msra.mxu0 %v616
    %656 = vmatprep.subr.mxu0 0.0
    %657 = vmatpush1.msra.mxu0 0.0
    %658 = vmatprep.subr.mxu0 0.0
    %659 = vmatpush1.msra.mxu0 0.0
    %660 = vmatprep.subr.mxu0 0.0
    %661 = vmatpush1.msra.mxu0 0.0
    %662 = vmatprep.subr.mxu0 0.0
    %663 = vmatpush1.msra.mxu0 0.0
    %664 = vmatprep.subr.mxu0 0.0
    %665 = vmatpush1.msra.mxu0 0.0
    %666 = vmatprep.subr.mxu0 0.0
    %667 = vmatpush1.msra.mxu0 0.0
    %668 = vmatprep.subr.mxu0 0.0
    %669 = vmatpush1.msra.mxu0 0.0
    %670 = vmatprep.subr.mxu0 0.0
    %671 = vmatpush1.msra.mxu0 0.0
    %672 = vmatprep.subr.mxu0 0.0
    %673 = vmatpush1.msra.mxu0 0.0
    %674 = vmatprep.subr.mxu0 0.0
    %675 = vmatpush1.msra.mxu0 0.0
    %676 = vmatprep.subr.mxu0 0.0
    %677 = vmatpush1.msra.mxu0 0.0
    %678 = vmatprep.subr.mxu0 0.0
    %679 = vmatpush1.msra.mxu0 0.0
    %680 = vmatprep.subr.mxu0 0.0
    %681 = vmatpush1.msra.mxu0 0.0
    %682 = vmatprep.subr.mxu0 0.0
    %683 = vmatpush1.msra.mxu0 0.0
    %684 = vmatprep.subr.mxu0 0.0
    %685 = vmatpush1.msra.mxu0 0.0
    %686 = vmatprep.subr.mxu0 0.0
    %687 = vmatpush1.msra.mxu0 0.0
    %688 = vmatprep.mubr.f32.mxu0 0.0
    %689 = vmatmul.mubr.f32.gmra.mrb[0].mxu0 %v600
    %v690 = vpop.f32.mrb[0].mxu0
    %v691 = vadd.f32 %v622, %v690
    %v692 = vpop.f32.mrb[0].mxu0
    %693 = vdwg.mxu0
    %694 = vst [vmem:[#allocation17] sm:$0xff] %v460
    %695 = vst [vmem:[#allocation18] sm:$0xff] %v462
    %v696 = vxor.u32 %v691, 2147483648
    %v697 = vmul.f32 %v696, 1.442695
    %v698 = vpow.pop %v697
    %v699 = vadd.f32 %v698, 1.0
    %v700 = vrcp.pop %v699
    %v701 = vmul.f32 1.0, %v700
    %702 = vst [vmem:[#allocation20] sm:$0xff] %v701
    // Predicated region
    $region82: #{tpu_custom_call.1} parent=1 // pred_check
      _
    $region83: #{tpu_custom_call.1} parent=1 // pred_check_branch
      %704 = sbr.rel (0) target = $region85
    $region84: #{tpu_custom_call.1} parent=1 // pred_region
      %s706 = ssub.s32 128, 128
      %707 = vsyncadd [#allocation5], %s706
      %s709 = sshll.u32 [#allocation17], 4
      %s710 = int_to_ptr.vmem [resolvable:$true] %s709
      %712 = dma.vmem_to_hbm [thread:$0]  %s710, 128, %s12, [#allocation5]
    $region85: #{tpu_custom_call.1} parent=1 // pred_fallthru
      _
    // Predicated region
    $region86: #{tpu_custom_call.1} parent=1 // pred_check
      _
    $region87: #{tpu_custom_call.1} parent=1 // pred_check_branch
      %714 = sbr.rel (0) target = $region89
    $region88: #{tpu_custom_call.1} parent=1 // pred_region
      %s716 = ssub.s32 128, 128
      %717 = vsyncadd [#allocation19], %s716
      %s719 = sshll.u32 [#allocation18], 4
      %s720 = int_to_ptr.vmem [resolvable:$true] %s719
      %722 = dma.vmem_to_hbm [thread:$0]  %s720, 128, %s13, [#allocation19]
    $region89: #{tpu_custom_call.1} parent=1 // pred_fallthru
      _
    // Predicated region
    $region90: #{tpu_custom_call.1} parent=1 // pred_check
      _
    $region91: #{tpu_custom_call.1} parent=1 // pred_check_branch
      %724 = sbr.rel (0) target = $region93
    $region92: #{tpu_custom_call.1} parent=1 // pred_region
      %s726 = ssub.s32 128, 128
      %727 = vsyncadd [#allocation19], %s726
      %s729 = sshll.u32 [#allocation20], 4
      %s730 = int_to_ptr.vmem [resolvable:$true] %s729
      %732 = dma.vmem_to_hbm [thread:$0]  %s730, 128, %s14, [#allocation19]
    $region93: #{tpu_custom_call.1} parent=1 // pred_fallthru
      _
    // Predicated region
    $region94: #{tpu_custom_call.1} parent=1 // pred_check
      _
    $region95: #{tpu_custom_call.1} parent=1 // pred_check_branch
      %734 = sbr.rel (0) target = $region97
    $region96: #{tpu_custom_call.1} parent=1 // pred_region
      %735 = dma.done [#allocation5], 128
    $region97: #{tpu_custom_call.1} parent=1 // pred_fallthru
      _
    // Predicated region
    $region98: #{tpu_custom_call.1} parent=1 // pred_check
      _
    $region99: #{tpu_custom_call.1} parent=1 // pred_check_branch
      %737 = sbr.rel (0) target = $region101
    $region100: #{tpu_custom_call.1} parent=1 // pred_region
      %738 = dma.done [#allocation19], 128
    $region101: #{tpu_custom_call.1} parent=1 // pred_fallthru
      _
    // Predicated region
    $region102: #{tpu_custom_call.1} parent=1 // pred_check
      _
    $region103: #{tpu_custom_call.1} parent=1 // pred_check_branch
      %740 = sbr.rel (0) target = $region105
    $region104: #{tpu_custom_call.1} parent=1 // pred_region
      %741 = dma.done [#allocation19], 128
    $region105: #{tpu_custom_call.1} parent=1 // pred_fallthru
      _
    %742 = vsyncpa [#allocation4], 1
    %743 = vsyncpa [#allocation7], 1
    %744 = vsyncpa [#allocation10], 1
    %745 = vsyncpa [#allocation13], 1
    %746 = vsyncpa [#allocation16], 1
    %747 = vsyncpa [#allocation5], 1
    %748 = vsyncpa [#allocation19], 1

</llo_original>
